<compile_context>
chip_gen: v7x
topology: tpu7x:2x2x1
jax: 0.10.0
libtpu: 0.0.40
codegen_flags: <defaults>
</compile_context>

<pallas_src>
import functools

import jax
import jax.numpy as jnp
from jax.experimental import pallas as pl
from jax.experimental.pallas import tpu as pltpu


# ----------------------------- shared cell math ----------------------------- #

def _lstm_cell_math(gates, c_prev, H):
    """gates: (B, 4H) pre-activation [i, f, g, o]; returns (h_new, c_new)."""
    i = jax.nn.sigmoid(gates[:, 0 * H:1 * H])
    f = jax.nn.sigmoid(gates[:, 1 * H:2 * H])
    g = jnp.tanh(gates[:, 2 * H:3 * H])
    o = jax.nn.sigmoid(gates[:, 3 * H:4 * H])
    c_new = f * c_prev + i * g
    h_new = o * jnp.tanh(c_new)
    return h_new, c_new


# ----------------------------- Pallas kernels ------------------------------ #

def _lstm_seq_kernel(x_ref, wih_ref, whh_ref, b_ref, out_ref,
                     gates_sc, h_sc, c_sc, *, T, B, H, reverse):
    """Full-sequence LSTM (used for non-last layers). Single invocation, no grid.

    x_ref: (T*B, E)  wih_ref: (E, 4H)  whh_ref: (H, 4H)  b_ref: (1, 4H)
    out_ref: (T, B, H)   gates_sc: (T*B, 4H)   h_sc/c_sc: (B, H)
    """
    # Hoisted input projection + bias: one MXU call covering all T steps.
    gates_sc[...] = (jnp.dot(x_ref[...], wih_ref[...],
                             preferred_element_type=jnp.float32) + b_ref[...])
    h_sc[...] = jnp.zeros_like(h_sc)
    c_sc[...] = jnp.zeros_like(c_sc)

    @pl.loop(0, T, unroll=True)
    def _(s):
        t = (T - 1 - s) if reverse else s            # reversal folded into the index
        gates = gates_sc[pl.ds(t * B, B), :] + jnp.dot(
            h_sc[...], whh_ref[...], preferred_element_type=jnp.float32)
        h_new, c_new = _lstm_cell_math(gates, c_sc[...], H)
        h_sc[...] = h_new
        c_sc[...] = c_new
        out_ref[t] = h_new                           # VMEM store; 1 writeback DMA total


def _lstm_last_bi_kernel(x_ref, wih_f_ref, whh_f_ref, b_f_ref,
                         wih_b_ref, b_b_ref,
                         wout_f_ref, wout_b_ref, bout_ref,
                         o_ref, gates_sc, h_sc, c_sc, *, T, B, H):
    """Last bidirectional layer fused with the classifier Linear.

    Produces linear(concat([h_fwd_final, h_bwd@t=T-1])) directly as (B, L).
    """
    # Forward direction: hoisted input projection (+bias), then serial recurrence.
    gates_sc[...] = (jnp.dot(x_ref[...], wih_f_ref[...],
                             preferred_element_type=jnp.float32) + b_f_ref[...])
    h_sc[...] = jnp.zeros_like(h_sc)
    c_sc[...] = jnp.zeros_like(c_sc)

    @pl.loop(0, T, unroll=True)
    def _(t):
        gates = gates_sc[pl.ds(t * B, B), :] + jnp.dot(
            h_sc[...], whh_f_ref[...], preferred_element_type=jnp.float32)
        h_new, c_new = _lstm_cell_math(gates, c_sc[...], H)
        h_sc[...] = h_new
        c_sc[...] = c_new

    h_fwd = h_sc[...]

    # Backward direction: out[:, -1, :] only needs ONE cell step on x[T-1] from zero
    # state (h0 = 0 => the W_hh_b term vanishes).
    gates_b = (jnp.dot(x_ref[pl.ds((T - 1) * B, B), :], wih_b_ref[...],
                       preferred_element_type=jnp.float32) + b_b_ref[...])
    h_bwd, _ = _lstm_cell_math(gates_b, jnp.zeros((B, H), jnp.float32), H)

    # Fused output Linear; concat([h_fwd, h_bwd]) expressed via split weights.
    o_ref[...] = (jnp.dot(h_fwd, wout_f_ref[...], preferred_element_type=jnp.float32)
                  + jnp.dot(h_bwd, wout_b_ref[...], preferred_element_type=jnp.float32)
                  + bout_ref[...])


def _lstm_last_uni_kernel(x_ref, wih_ref, whh_ref, b_ref,
                          wout_ref, bout_ref,
                          o_ref, gates_sc, h_sc, c_sc, *, T, B, H):
    """Last unidirectional layer fused with the classifier Linear."""
    gates_sc[...] = (jnp.dot(x_ref[...], wih_ref[...],
                             preferred_element_type=jnp.float32) + b_ref[...])
    h_sc[...] = jnp.zeros_like(h_sc)
    c_sc[...] = jnp.zeros_like(c_sc)

    @pl.loop(0, T, unroll=True)
    def _(t):
        gates = gates_sc[pl.ds(t * B, B), :] + jnp.dot(
            h_sc[...], whh_ref[...], preferred_element_type=jnp.float32)
        h_new, c_new = _lstm_cell_math(gates, c_sc[...], H)
        h_sc[...] = h_new
        c_sc[...] = c_new

    o_ref[...] = (jnp.dot(h_sc[...], wout_ref[...],
                          preferred_element_type=jnp.float32) + bout_ref[...])


# ----------------------------- kernel wrappers ------------------------------ #

def lstm_seq_pallas(x_tbe, w_ih, w_hh, b, *, reverse):
    """Single-direction full-sequence LSTM. x_tbe: (T, B, E) -> (T, B, H)."""
    T, B, E = x_tbe.shape
    H = w_hh.shape[0]
    kernel = functools.partial(_lstm_seq_kernel, T=T, B=B, H=H, reverse=reverse)
    return pl.pallas_call(
        kernel,
        out_shape=jax.ShapeDtypeStruct((T, B, H), jnp.float32),
        scratch_shapes=[
            pltpu.VMEM((T * B, 4 * H), jnp.float32),   # hoisted input-projection gates
            pltpu.VMEM((B, H), jnp.float32),           # h state
            pltpu.VMEM((B, H), jnp.float32),           # c state
        ],
    )(x_tbe.reshape(T * B, E), w_ih, w_hh, b.reshape(1, 4 * H))


def lstm_last_bi_linear_pallas(x_tbe, w_ih_f, w_hh_f, b_f, w_ih_b, b_b,
                               w_out_f, w_out_b, b_out):
    T, B, E = x_tbe.shape
    H = w_hh_f.shape[0]
    L = w_out_f.shape[1]
    kernel = functools.partial(_lstm_last_bi_kernel, T=T, B=B, H=H)
    return pl.pallas_call(
        kernel,
        out_shape=jax.ShapeDtypeStruct((B, L), jnp.float32),
        scratch_shapes=[
            pltpu.VMEM((T * B, 4 * H), jnp.float32),
            pltpu.VMEM((B, H), jnp.float32),
            pltpu.VMEM((B, H), jnp.float32),
        ],
    )(x_tbe.reshape(T * B, E), w_ih_f, w_hh_f, b_f.reshape(1, 4 * H),
      w_ih_b, b_b.reshape(1, 4 * H), w_out_f, w_out_b, b_out.reshape(1, L))


def lstm_last_uni_linear_pallas(x_tbe, w_ih, w_hh, b, w_out, b_out):
    T, B, E = x_tbe.shape
    H = w_hh.shape[0]
    L = w_out.shape[1]
    kernel = functools.partial(_lstm_last_uni_kernel, T=T, B=B, H=H)
    return pl.pallas_call(
        kernel,
        out_shape=jax.ShapeDtypeStruct((B, L), jnp.float32),
        scratch_shapes=[
            pltpu.VMEM((T * B, 4 * H), jnp.float32),
            pltpu.VMEM((B, H), jnp.float32),
            pltpu.VMEM((B, H), jnp.float32),
        ],
    )(x_tbe.reshape(T * B, E), w_ih, w_hh, b.reshape(1, 4 * H),
      w_out, b_out.reshape(1, L))


# ----------------------------- Model wrapper ------------------------------- #

def textrnn_forward(x_ids, params, cfg):
    """Mirrors TextRNN.forward: embed -> LSTM(h0=c0=0) -> linear(out[:, -1, :])."""
    embed = params["embed"][x_ids]                   # (B, T, E)  gather = plain-JAX glue
    x = jnp.transpose(embed, (1, 0, 2))              # (T, B, E)  time-major

    num_dir = 2 if cfg["bidirectional"] else 1
    H = cfg["hidden_size"]
    n_layers = cfg["layer_num"]

    layer_in = x
    # Intermediate layers: the next layer needs the full (T, B, num_dir*H) sequence.
    for l in range(n_layers - 1):
        outs = []
        for d in range(num_dir):
            w_ih, w_hh, b = params["lstm"][(l, d)]
            outs.append(lstm_seq_pallas(layer_in, w_ih, w_hh, b, reverse=(d == 1)))
        layer_in = jnp.concatenate(outs, axis=-1) if num_dir == 2 else outs[0]

    # Last layer fused with the classifier Linear: only out[:, -1, :] is consumed.
    l = n_layers - 1
    w_out, b_out = params["w_out"], params["b_out"]
    if cfg["bidirectional"]:
        w_ih_f, w_hh_f, b_f = params["lstm"][(l, 0)]
        w_ih_b, _w_hh_b, b_b = params["lstm"][(l, 1)]    # W_hh_b unused: h0 = c0 = 0
        return lstm_last_bi_linear_pallas(layer_in, w_ih_f, w_hh_f, b_f, w_ih_b, b_b,
                                          w_out[:H], w_out[H:], b_out)
    else:
        w_ih, w_hh, b = params["lstm"][(l, 0)]
        return lstm_last_uni_linear_pallas(layer_in, w_ih, w_hh, b, w_out, b_out)


# --------------------------- Pure-JAX reference ----------------------------- #

def _lstm_cell_ref(x_t, h, c, w_ih, w_hh, b):
    gates = x_t @ w_ih + h @ w_hh + b
    i, f, g, o = jnp.split(gates, 4, axis=-1)
    c = jax.nn.sigmoid(f) * c + jax.nn.sigmoid(i) * jnp.tanh(g)
    h = jax.nn.sigmoid(o) * jnp.tanh(c)
    return h, c


def textrnn_ref(x_ids, params, cfg):
    embed = params["embed"][x_ids]                   # (B, T, E)
    B, T, _ = embed.shape
    H = cfg["hidden_size"]
    num_dir = 2 if cfg["bidirectional"] else 1
    layer_in = embed
    for l in range(cfg["layer_num"]):
        outs = []
        for d in range(num_dir):
            w_ih, w_hh, b = params["lstm"][(l, d)]
            h = jnp.zeros((B, H), jnp.float32)
            c = jnp.zeros((B, H), jnp.float32)
            hs = [None] * T
            order = range(T) if d == 0 else range(T - 1, -1, -1)
            for t in order:
                h, c = _lstm_cell_ref(layer_in[:, t, :], h, c, w_ih, w_hh, b)
                hs[t] = h
            outs.append(jnp.stack(hs, axis=1))
        layer_in = jnp.concatenate(outs, axis=-1) if num_dir == 2 else outs[0]
    return layer_in[:, -1, :] @ params["w_out"] + params["b_out"]


# --------------------------------- Main ------------------------------------ #

def init_params(key, cfg):
    vocab, E, H = cfg["vocab_size"], cfg["embedding_dim"], cfg["hidden_size"]
    num_dir = 2 if cfg["bidirectional"] else 1
    ks = iter(jax.random.split(key, 64))

    params = {"embed": 0.1 * jax.random.normal(next(ks), (vocab, E), jnp.float32),
              "lstm": {}}
    for l in range(cfg["layer_num"]):
        in_size = E if l == 0 else num_dir * H
        for d in range(num_dir):
            w_ih = 0.1 * jax.random.normal(next(ks), (in_size, 4 * H), jnp.float32)
            w_hh = 0.1 * jax.random.normal(next(ks), (H, 4 * H), jnp.float32)
            b = 0.1 * jax.random.normal(next(ks), (4 * H,), jnp.float32)  # b_ih + b_hh fused
            params["lstm"][(l, d)] = (w_ih, w_hh, b)
    params["w_out"] = 0.1 * jax.random.normal(
        next(ks), (num_dir * H, cfg["label_num"]), jnp.float32)
    params["b_out"] = 0.1 * jax.random.normal(next(ks), (cfg["label_num"],), jnp.float32)
    return params


if __name__ == "__main__":
    B, T = 2, 8
    configs = [
        dict(vocab_size=50, embedding_dim=32, hidden_size=32,
             layer_num=1, bidirectional=True, label_num=4),     # spec's default-style config
        dict(vocab_size=50, embedding_dim=32, hidden_size=32,
             layer_num=2, bidirectional=True, label_num=4),     # exercises the seq kernel
        dict(vocab_size=50, embedding_dim=32, hidden_size=32,
             layer_num=1, bidirectional=False, label_num=4),    # exercises the uni kernel
    ]

    key = jax.random.PRNGKey(0)
    for idx, cfg in enumerate(configs):
        k_param, k_ids = jax.random.split(jax.random.fold_in(key, idx))
        params = init_params(k_param, cfg)
        x_ids = jax.random.randint(k_ids, (B, T), 0, cfg["vocab_size"], dtype=jnp.int32)

        out = jax.block_until_ready(textrnn_forward(x_ids, params, cfg))
        ref = jax.block_until_ready(textrnn_ref(x_ids, params, cfg))

        assert out.shape == (B, cfg["label_num"]), (cfg, out.shape)
        assert jnp.allclose(out, ref, atol=1e-4, rtol=1e-4), (cfg, out, ref)

    print("KERNEL_OK")
</pallas_src>

<mosaic_0001>
module attributes {stable_mosaic.version = 11 : i64} {
  func.func @_lstm_last_bi_kernel(%arg0: memref<16x32xf32, #tpu.memory_space<vmem>>, %arg1: memref<32x128xf32, #tpu.memory_space<vmem>>, %arg2: memref<32x128xf32, #tpu.memory_space<vmem>>, %arg3: memref<1x128xf32, #tpu.memory_space<vmem>>, %arg4: memref<32x128xf32, #tpu.memory_space<vmem>>, %arg5: memref<1x128xf32, #tpu.memory_space<vmem>>, %arg6: memref<32x4xf32, #tpu.memory_space<vmem>>, %arg7: memref<32x4xf32, #tpu.memory_space<vmem>>, %arg8: memref<1x4xf32, #tpu.memory_space<vmem>>, %arg9: memref<2x4xf32, #tpu.memory_space<vmem>>, %arg10: memref<16x128xf32, #tpu.memory_space<vmem>>, %arg11: memref<2x32xf32, #tpu.memory_space<vmem>>, %arg12: memref<2x32xf32, #tpu.memory_space<vmem>>) attributes {dimension_semantics = [], scalar_prefetch = 0 : i64, scratch_operands = 3 : i64, tpu.core_type = #tpu.core_type<tc>} {
    %c0 = arith.constant 0 : index
    %c0_0 = arith.constant 0 : index
    %0 = vector.load %arg0[%c0, %c0_0] : memref<16x32xf32, #tpu.memory_space<vmem>>, vector<16x32xf32>
    %c0_1 = arith.constant 0 : index
    %c0_2 = arith.constant 0 : index
    %1 = vector.load %arg1[%c0_1, %c0_2] : memref<32x128xf32, #tpu.memory_space<vmem>>, vector<32x128xf32>
    %cst = arith.constant dense<0.000000e+00> : vector<16x128xf32>
    %2 = tpu.matmul %0, %1, %cst {dimension_numbers = #tpu.dot_dimension_numbers<[1], [0], [0], [1], [0, 0, 1, 1], [], []>} : vector<16x32xf32>, vector<32x128xf32>, vector<16x128xf32> -> vector<16x128xf32>
    %c0_3 = arith.constant 0 : index
    %c0_4 = arith.constant 0 : index
    %3 = vector.load %arg3[%c0_3, %c0_4] : memref<1x128xf32, #tpu.memory_space<vmem>>, vector<1x128xf32>
    %4 = vector.broadcast %3 : vector<1x128xf32> to vector<16x128xf32>
    %5 = arith.addf %2, %4 : vector<16x128xf32>
    %c0_5 = arith.constant 0 : index
    %c0_6 = arith.constant 0 : index
    %6 = vector.load %arg10[%c0_5, %c0_6] : memref<16x128xf32, #tpu.memory_space<vmem>>, vector<16x128xf32>
    tpu.vector_store %arg10[%c0_5, %c0_6], %5 {strides = array<i32>} : memref<16x128xf32, #tpu.memory_space<vmem>>, vector<16x128xf32>,
    %cst_7 = arith.constant 0.000000e+00 : f32
    %7 = vector.broadcast %cst_7 : f32 to vector<2x32xf32>
    %c0_8 = arith.constant 0 : index
    %c0_9 = arith.constant 0 : index
    %8 = vector.load %arg11[%c0_8, %c0_9] : memref<2x32xf32, #tpu.memory_space<vmem>>, vector<2x32xf32>
    tpu.vector_store %arg11[%c0_8, %c0_9], %7 {strides = array<i32>} : memref<2x32xf32, #tpu.memory_space<vmem>>, vector<2x32xf32>,
    %cst_10 = arith.constant 0.000000e+00 : f32
    %9 = vector.broadcast %cst_10 : f32 to vector<2x32xf32>
    %c0_11 = arith.constant 0 : index
    %c0_12 = arith.constant 0 : index
    %10 = vector.load %arg12[%c0_11, %c0_12] : memref<2x32xf32, #tpu.memory_space<vmem>>, vector<2x32xf32>
    tpu.vector_store %arg12[%c0_11, %c0_12], %9 {strides = array<i32>} : memref<2x32xf32, #tpu.memory_space<vmem>>, vector<2x32xf32>,
    %c0_i32 = arith.constant 0 : i32
    %c1_i32 = arith.constant 1 : i32
    %11 = arith.muli %c0_i32, %c1_i32 : i32
    %c0_i32_13 = arith.constant 0 : i32
    %12 = arith.addi %c0_i32_13, %11 : i32
    %c2_i32 = arith.constant 2 : i32
    %13 = arith.muli %12, %c2_i32 : i32
    %14 = arith.index_cast %13 : i32 to index
    %c0_14 = arith.constant 0 : index
    %15 = vector.load %arg10[%14, %c0_14] : memref<16x128xf32, #tpu.memory_space<vmem>>, vector<2x128xf32>
    %c0_15 = arith.constant 0 : index
    %c0_16 = arith.constant 0 : index
    %16 = vector.load %arg11[%c0_15, %c0_16] : memref<2x32xf32, #tpu.memory_space<vmem>>, vector<2x32xf32>
    %c0_17 = arith.constant 0 : index
    %c0_18 = arith.constant 0 : index
    %17 = vector.load %arg2[%c0_17, %c0_18] : memref<32x128xf32, #tpu.memory_space<vmem>>, vector<32x128xf32>
    %cst_19 = arith.constant dense<0.000000e+00> : vector<2x128xf32>
    %18 = tpu.matmul %16, %17, %cst_19 {dimension_numbers = #tpu.dot_dimension_numbers<[1], [0], [0], [1], [0, 0, 1, 1], [], []>} : vector<2x32xf32>, vector<32x128xf32>, vector<2x128xf32> -> vector<2x128xf32>
    %19 = arith.addf %15, %18 : vector<2x128xf32>
    %c0_20 = arith.constant 0 : index
    %c0_21 = arith.constant 0 : index
    %20 = vector.load %arg12[%c0_20, %c0_21] : memref<2x32xf32, #tpu.memory_space<vmem>>, vector<2x32xf32>
    %21 = vector.extract_strided_slice %19 {offsets = [0, 0], sizes = [2, 32], strides = [1, 1]} : vector<2x128xf32> to vector<2x32xf32>
    %22 = arith.negf %21 : vector<2x32xf32>
    %23 = math.exp %22 : vector<2x32xf32>
    %cst_22 = arith.constant 1.000000e+00 : f32
    %24 = vector.broadcast %cst_22 : f32 to vector<2x32xf32>
    %25 = arith.addf %24, %23 : vector<2x32xf32>
    %26 = arith.divf %24, %25 : vector<2x32xf32>
    %27 = vector.extract_strided_slice %19 {offsets = [0, 32], sizes = [2, 32], strides = [1, 1]} : vector<2x128xf32> to vector<2x32xf32>
    %28 = arith.negf %27 : vector<2x32xf32>
    %29 = math.exp %28 : vector<2x32xf32>
    %cst_23 = arith.constant 1.000000e+00 : f32
    %30 = vector.broadcast %cst_23 : f32 to vector<2x32xf32>
    %31 = arith.addf %30, %29 : vector<2x32xf32>
    %32 = arith.divf %30, %31 : vector<2x32xf32>
    %33 = vector.extract_strided_slice %19 {offsets = [0, 64], sizes = [2, 32], strides = [1, 1]} : vector<2x128xf32> to vector<2x32xf32>
    %34 = math.tanh %33 : vector<2x32xf32>
    %35 = vector.extract_strided_slice %19 {offsets = [0, 96], sizes = [2, 32], strides = [1, 1]} : vector<2x128xf32> to vector<2x32xf32>
    %36 = arith.negf %35 : vector<2x32xf32>
    %37 = math.exp %36 : vector<2x32xf32>
    %cst_24 = arith.constant 1.000000e+00 : f32
    %38 = vector.broadcast %cst_24 : f32 to vector<2x32xf32>
    %39 = arith.addf %38, %37 : vector<2x32xf32>
    %40 = arith.divf %38, %39 : vector<2x32xf32>
    %41 = arith.mulf %32, %20 : vector<2x32xf32>
    %42 = arith.mulf %26, %34 : vector<2x32xf32>
    %43 = arith.addf %41, %42 : vector<2x32xf32>
    %44 = math.tanh %43 : vector<2x32xf32>
    %45 = arith.mulf %40, %44 : vector<2x32xf32>
    %c0_25 = arith.constant 0 : index
    %c0_26 = arith.constant 0 : index
    %46 = vector.load %arg11[%c0_25, %c0_26] : memref<2x32xf32, #tpu.memory_space<vmem>>, vector<2x32xf32>
    tpu.vector_store %arg11[%c0_25, %c0_26], %45 {strides = array<i32>} : memref<2x32xf32, #tpu.memory_space<vmem>>, vector<2x32xf32>,
    %c0_27 = arith.constant 0 : index
    %c0_28 = arith.constant 0 : index
    %47 = vector.load %arg12[%c0_27, %c0_28] : memref<2x32xf32, #tpu.memory_space<vmem>>, vector<2x32xf32>
    tpu.vector_store %arg12[%c0_27, %c0_28], %43 {strides = array<i32>} : memref<2x32xf32, #tpu.memory_space<vmem>>, vector<2x32xf32>,
    %c1_i32_29 = arith.constant 1 : i32
    %c1_i32_30 = arith.constant 1 : i32
    %48 = arith.muli %c1_i32_29, %c1_i32_30 : i32
    %c0_i32_31 = arith.constant 0 : i32
    %49 = arith.addi %c0_i32_31, %48 : i32
    %c2_i32_32 = arith.constant 2 : i32
    %50 = arith.muli %49, %c2_i32_32 : i32
    %51 = arith.index_cast %50 : i32 to index
    %c0_33 = arith.constant 0 : index
    %52 = vector.load %arg10[%51, %c0_33] : memref<16x128xf32, #tpu.memory_space<vmem>>, vector<2x128xf32>
    %c0_34 = arith.constant 0 : index
    %c0_35 = arith.constant 0 : index
    %53 = vector.load %arg11[%c0_34, %c0_35] : memref<2x32xf32, #tpu.memory_space<vmem>>, vector<2x32xf32>
    %c0_36 = arith.constant 0 : index
    %c0_37 = arith.constant 0 : index
    %54 = vector.load %arg2[%c0_36, %c0_37] : memref<32x128xf32, #tpu.memory_space<vmem>>, vector<32x128xf32>
    %cst_38 = arith.constant dense<0.000000e+00> : vector<2x128xf32>
    %55 = tpu.matmul %53, %54, %cst_38 {dimension_numbers = #tpu.dot_dimension_numbers<[1], [0], [0], [1], [0, 0, 1, 1], [], []>} : vector<2x32xf32>, vector<32x128xf32>, vector<2x128xf32> -> vector<2x128xf32>
    %56 = arith.addf %52, %55 : vector<2x128xf32>
    %c0_39 = arith.constant 0 : index
    %c0_40 = arith.constant 0 : index
    %57 = vector.load %arg12[%c0_39, %c0_40] : memref<2x32xf32, #tpu.memory_space<vmem>>, vector<2x32xf32>
    %58 = vector.extract_strided_slice %56 {offsets = [0, 0], sizes = [2, 32], strides = [1, 1]} : vector<2x128xf32> to vector<2x32xf32>
    %59 = arith.negf %58 : vector<2x32xf32>
    %60 = math.exp %59 : vector<2x32xf32>
    %cst_41 = arith.constant 1.000000e+00 : f32
    %61 = vector.broadcast %cst_41 : f32 to vector<2x32xf32>
    %62 = arith.addf %61, %60 : vector<2x32xf32>
    %63 = arith.divf %61, %62 : vector<2x32xf32>
    %64 = vector.extract_strided_slice %56 {offsets = [0, 32], sizes = [2, 32], strides = [1, 1]} : vector<2x128xf32> to vector<2x32xf32>
    %65 = arith.negf %64 : vector<2x32xf32>
    %66 = math.exp %65 : vector<2x32xf32>
    %cst_42 = arith.constant 1.000000e+00 : f32
    %67 = vector.broadcast %cst_42 : f32 to vector<2x32xf32>
    %68 = arith.addf %67, %66 : vector<2x32xf32>
    %69 = arith.divf %67, %68 : vector<2x32xf32>
    %70 = vector.extract_strided_slice %56 {offsets = [0, 64], sizes = [2, 32], strides = [1, 1]} : vector<2x128xf32> to vector<2x32xf32>
    %71 = math.tanh %70 : vector<2x32xf32>
    %72 = vector.extract_strided_slice %56 {offsets = [0, 96], sizes = [2, 32], strides = [1, 1]} : vector<2x128xf32> to vector<2x32xf32>
    %73 = arith.negf %72 : vector<2x32xf32>
    %74 = math.exp %73 : vector<2x32xf32>
    %cst_43 = arith.constant 1.000000e+00 : f32
    %75 = vector.broadcast %cst_43 : f32 to vector<2x32xf32>
    %76 = arith.addf %75, %74 : vector<2x32xf32>
    %77 = arith.divf %75, %76 : vector<2x32xf32>
    %78 = arith.mulf %69, %57 : vector<2x32xf32>
    %79 = arith.mulf %63, %71 : vector<2x32xf32>
    %80 = arith.addf %78, %79 : vector<2x32xf32>
    %81 = math.tanh %80 : vector<2x32xf32>
    %82 = arith.mulf %77, %81 : vector<2x32xf32>
    %c0_44 = arith.constant 0 : index
    %c0_45 = arith.constant 0 : index
    %83 = vector.load %arg11[%c0_44, %c0_45] : memref<2x32xf32, #tpu.memory_space<vmem>>, vector<2x32xf32>
    tpu.vector_store %arg11[%c0_44, %c0_45], %82 {strides = array<i32>} : memref<2x32xf32, #tpu.memory_space<vmem>>, vector<2x32xf32>,
    %c0_46 = arith.constant 0 : index
    %c0_47 = arith.constant 0 : index
    %84 = vector.load %arg12[%c0_46, %c0_47] : memref<2x32xf32, #tpu.memory_space<vmem>>, vector<2x32xf32>
    tpu.vector_store %arg12[%c0_46, %c0_47], %80 {strides = array<i32>} : memref<2x32xf32, #tpu.memory_space<vmem>>, vector<2x32xf32>,
    %c2_i32_48 = arith.constant 2 : i32
    %c1_i32_49 = arith.constant 1 : i32
    %85 = arith.muli %c2_i32_48, %c1_i32_49 : i32
    %c0_i32_50 = arith.constant 0 : i32
    %86 = arith.addi %c0_i32_50, %85 : i32
    %c2_i32_51 = arith.constant 2 : i32
    %87 = arith.muli %86, %c2_i32_51 : i32
    %88 = arith.index_cast %87 : i32 to index
    %c0_52 = arith.constant 0 : index
    %89 = vector.load %arg10[%88, %c0_52] : memref<16x128xf32, #tpu.memory_space<vmem>>, vector<2x128xf32>
    %c0_53 = arith.constant 0 : index
    %c0_54 = arith.constant 0 : index
    %90 = vector.load %arg11[%c0_53, %c0_54] : memref<2x32xf32, #tpu.memory_space<vmem>>, vector<2x32xf32>
    %c0_55 = arith.constant 0 : index
    %c0_56 = arith.constant 0 : index
    %91 = vector.load %arg2[%c0_55, %c0_56] : memref<32x128xf32, #tpu.memory_space<vmem>>, vector<32x128xf32>
    %cst_57 = arith.constant dense<0.000000e+00> : vector<2x128xf32>
    %92 = tpu.matmul %90, %91, %cst_57 {dimension_numbers = #tpu.dot_dimension_numbers<[1], [0], [0], [1], [0, 0, 1, 1], [], []>} : vector<2x32xf32>, vector<32x128xf32>, vector<2x128xf32> -> vector<2x128xf32>
    %93 = arith.addf %89, %92 : vector<2x128xf32>
    %c0_58 = arith.constant 0 : index
    %c0_59 = arith.constant 0 : index
    %94 = vector.load %arg12[%c0_58, %c0_59] : memref<2x32xf32, #tpu.memory_space<vmem>>, vector<2x32xf32>
    %95 = vector.extract_strided_slice %93 {offsets = [0, 0], sizes = [2, 32], strides = [1, 1]} : vector<2x128xf32> to vector<2x32xf32>
    %96 = arith.negf %95 : vector<2x32xf32>
    %97 = math.exp %96 : vector<2x32xf32>
    %cst_60 = arith.constant 1.000000e+00 : f32
    %98 = vector.broadcast %cst_60 : f32 to vector<2x32xf32>
    %99 = arith.addf %98, %97 : vector<2x32xf32>
    %100 = arith.divf %98, %99 : vector<2x32xf32>
    %101 = vector.extract_strided_slice %93 {offsets = [0, 32], sizes = [2, 32], strides = [1, 1]} : vector<2x128xf32> to vector<2x32xf32>
    %102 = arith.negf %101 : vector<2x32xf32>
    %103 = math.exp %102 : vector<2x32xf32>
    %cst_61 = arith.constant 1.000000e+00 : f32
    %104 = vector.broadcast %cst_61 : f32 to vector<2x32xf32>
    %105 = arith.addf %104, %103 : vector<2x32xf32>
    %106 = arith.divf %104, %105 : vector<2x32xf32>
    %107 = vector.extract_strided_slice %93 {offsets = [0, 64], sizes = [2, 32], strides = [1, 1]} : vector<2x128xf32> to vector<2x32xf32>
    %108 = math.tanh %107 : vector<2x32xf32>
    %109 = vector.extract_strided_slice %93 {offsets = [0, 96], sizes = [2, 32], strides = [1, 1]} : vector<2x128xf32> to vector<2x32xf32>
    %110 = arith.negf %109 : vector<2x32xf32>
    %111 = math.exp %110 : vector<2x32xf32>
    %cst_62 = arith.constant 1.000000e+00 : f32
    %112 = vector.broadcast %cst_62 : f32 to vector<2x32xf32>
    %113 = arith.addf %112, %111 : vector<2x32xf32>
    %114 = arith.divf %112, %113 : vector<2x32xf32>
    %115 = arith.mulf %106, %94 : vector<2x32xf32>
    %116 = arith.mulf %100, %108 : vector<2x32xf32>
    %117 = arith.addf %115, %116 : vector<2x32xf32>
    %118 = math.tanh %117 : vector<2x32xf32>
    %119 = arith.mulf %114, %118 : vector<2x32xf32>
    %c0_63 = arith.constant 0 : index
    %c0_64 = arith.constant 0 : index
    %120 = vector.load %arg11[%c0_63, %c0_64] : memref<2x32xf32, #tpu.memory_space<vmem>>, vector<2x32xf32>
    tpu.vector_store %arg11[%c0_63, %c0_64], %119 {strides = array<i32>} : memref<2x32xf32, #tpu.memory_space<vmem>>, vector<2x32xf32>,
    %c0_65 = arith.constant 0 : index
    %c0_66 = arith.constant 0 : index
    %121 = vector.load %arg12[%c0_65, %c0_66] : memref<2x32xf32, #tpu.memory_space<vmem>>, vector<2x32xf32>
    tpu.vector_store %arg12[%c0_65, %c0_66], %117 {strides = array<i32>} : memref<2x32xf32, #tpu.memory_space<vmem>>, vector<2x32xf32>,
    %c3_i32 = arith.constant 3 : i32
    %c1_i32_67 = arith.constant 1 : i32
    %122 = arith.muli %c3_i32, %c1_i32_67 : i32
    %c0_i32_68 = arith.constant 0 : i32
    %123 = arith.addi %c0_i32_68, %122 : i32
    %c2_i32_69 = arith.constant 2 : i32
    %124 = arith.muli %123, %c2_i32_69 : i32
    %125 = arith.index_cast %124 : i32 to index
    %c0_70 = arith.constant 0 : index
    %126 = vector.load %arg10[%125, %c0_70] : memref<16x128xf32, #tpu.memory_space<vmem>>, vector<2x128xf32>
    %c0_71 = arith.constant 0 : index
    %c0_72 = arith.constant 0 : index
    %127 = vector.load %arg11[%c0_71, %c0_72] : memref<2x32xf32, #tpu.memory_space<vmem>>, vector<2x32xf32>
    %c0_73 = arith.constant 0 : index
    %c0_74 = arith.constant 0 : index
    %128 = vector.load %arg2[%c0_73, %c0_74] : memref<32x128xf32, #tpu.memory_space<vmem>>, vector<32x128xf32>
    %cst_75 = arith.constant dense<0.000000e+00> : vector<2x128xf32>
    %129 = tpu.matmul %127, %128, %cst_75 {dimension_numbers = #tpu.dot_dimension_numbers<[1], [0], [0], [1], [0, 0, 1, 1], [], []>} : vector<2x32xf32>, vector<32x128xf32>, vector<2x128xf32> -> vector<2x128xf32>
    %130 = arith.addf %126, %129 : vector<2x128xf32>
    %c0_76 = arith.constant 0 : index
    %c0_77 = arith.constant 0 : index
    %131 = vector.load %arg12[%c0_76, %c0_77] : memref<2x32xf32, #tpu.memory_space<vmem>>, vector<2x32xf32>
    %132 = vector.extract_strided_slice %130 {offsets = [0, 0], sizes = [2, 32], strides = [1, 1]} : vector<2x128xf32> to vector<2x32xf32>
    %133 = arith.negf %132 : vector<2x32xf32>
    %134 = math.exp %133 : vector<2x32xf32>
    %cst_78 = arith.constant 1.000000e+00 : f32
    %135 = vector.broadcast %cst_78 : f32 to vector<2x32xf32>
    %136 = arith.addf %135, %134 : vector<2x32xf32>
    %137 = arith.divf %135, %136 : vector<2x32xf32>
    %138 = vector.extract_strided_slice %130 {offsets = [0, 32], sizes = [2, 32], strides = [1, 1]} : vector<2x128xf32> to vector<2x32xf32>
    %139 = arith.negf %138 : vector<2x32xf32>
    %140 = math.exp %139 : vector<2x32xf32>
    %cst_79 = arith.constant 1.000000e+00 : f32
    %141 = vector.broadcast %cst_79 : f32 to vector<2x32xf32>
    %142 = arith.addf %141, %140 : vector<2x32xf32>
    %143 = arith.divf %141, %142 : vector<2x32xf32>
    %144 = vector.extract_strided_slice %130 {offsets = [0, 64], sizes = [2, 32], strides = [1, 1]} : vector<2x128xf32> to vector<2x32xf32>
    %145 = math.tanh %144 : vector<2x32xf32>
    %146 = vector.extract_strided_slice %130 {offsets = [0, 96], sizes = [2, 32], strides = [1, 1]} : vector<2x128xf32> to vector<2x32xf32>
    %147 = arith.negf %146 : vector<2x32xf32>
    %148 = math.exp %147 : vector<2x32xf32>
    %cst_80 = arith.constant 1.000000e+00 : f32
    %149 = vector.broadcast %cst_80 : f32 to vector<2x32xf32>
    %150 = arith.addf %149, %148 : vector<2x32xf32>
    %151 = arith.divf %149, %150 : vector<2x32xf32>
    %152 = arith.mulf %143, %131 : vector<2x32xf32>
    %153 = arith.mulf %137, %145 : vector<2x32xf32>
    %154 = arith.addf %152, %153 : vector<2x32xf32>
    %155 = math.tanh %154 : vector<2x32xf32>
    %156 = arith.mulf %151, %155 : vector<2x32xf32>
    %c0_81 = arith.constant 0 : index
    %c0_82 = arith.constant 0 : index
    %157 = vector.load %arg11[%c0_81, %c0_82] : memref<2x32xf32, #tpu.memory_space<vmem>>, vector<2x32xf32>
    tpu.vector_store %arg11[%c0_81, %c0_82], %156 {strides = array<i32>} : memref<2x32xf32, #tpu.memory_space<vmem>>, vector<2x32xf32>,
    %c0_83 = arith.constant 0 : index
    %c0_84 = arith.constant 0 : index
    %158 = vector.load %arg12[%c0_83, %c0_84] : memref<2x32xf32, #tpu.memory_space<vmem>>, vector<2x32xf32>
    tpu.vector_store %arg12[%c0_83, %c0_84], %154 {strides = array<i32>} : memref<2x32xf32, #tpu.memory_space<vmem>>, vector<2x32xf32>,
    %c4_i32 = arith.constant 4 : i32
    %c1_i32_85 = arith.constant 1 : i32
    %159 = arith.muli %c4_i32, %c1_i32_85 : i32
    %c0_i32_86 = arith.constant 0 : i32
    %160 = arith.addi %c0_i32_86, %159 : i32
    %c2_i32_87 = arith.constant 2 : i32
    %161 = arith.muli %160, %c2_i32_87 : i32
    %162 = arith.index_cast %161 : i32 to index
    %c0_88 = arith.constant 0 : index
    %163 = vector.load %arg10[%162, %c0_88] : memref<16x128xf32, #tpu.memory_space<vmem>>, vector<2x128xf32>
    %c0_89 = arith.constant 0 : index
    %c0_90 = arith.constant 0 : index
    %164 = vector.load %arg11[%c0_89, %c0_90] : memref<2x32xf32, #tpu.memory_space<vmem>>, vector<2x32xf32>
    %c0_91 = arith.constant 0 : index
    %c0_92 = arith.constant 0 : index
    %165 = vector.load %arg2[%c0_91, %c0_92] : memref<32x128xf32, #tpu.memory_space<vmem>>, vector<32x128xf32>
    %cst_93 = arith.constant dense<0.000000e+00> : vector<2x128xf32>
    %166 = tpu.matmul %164, %165, %cst_93 {dimension_numbers = #tpu.dot_dimension_numbers<[1], [0], [0], [1], [0, 0, 1, 1], [], []>} : vector<2x32xf32>, vector<32x128xf32>, vector<2x128xf32> -> vector<2x128xf32>
    %167 = arith.addf %163, %166 : vector<2x128xf32>
    %c0_94 = arith.constant 0 : index
    %c0_95 = arith.constant 0 : index
    %168 = vector.load %arg12[%c0_94, %c0_95] : memref<2x32xf32, #tpu.memory_space<vmem>>, vector<2x32xf32>
    %169 = vector.extract_strided_slice %167 {offsets = [0, 0], sizes = [2, 32], strides = [1, 1]} : vector<2x128xf32> to vector<2x32xf32>
    %170 = arith.negf %169 : vector<2x32xf32>
    %171 = math.exp %170 : vector<2x32xf32>
    %cst_96 = arith.constant 1.000000e+00 : f32
    %172 = vector.broadcast %cst_96 : f32 to vector<2x32xf32>
    %173 = arith.addf %172, %171 : vector<2x32xf32>
    %174 = arith.divf %172, %173 : vector<2x32xf32>
    %175 = vector.extract_strided_slice %167 {offsets = [0, 32], sizes = [2, 32], strides = [1, 1]} : vector<2x128xf32> to vector<2x32xf32>
    %176 = arith.negf %175 : vector<2x32xf32>
    %177 = math.exp %176 : vector<2x32xf32>
    %cst_97 = arith.constant 1.000000e+00 : f32
    %178 = vector.broadcast %cst_97 : f32 to vector<2x32xf32>
    %179 = arith.addf %178, %177 : vector<2x32xf32>
    %180 = arith.divf %178, %179 : vector<2x32xf32>
    %181 = vector.extract_strided_slice %167 {offsets = [0, 64], sizes = [2, 32], strides = [1, 1]} : vector<2x128xf32> to vector<2x32xf32>
    %182 = math.tanh %181 : vector<2x32xf32>
    %183 = vector.extract_strided_slice %167 {offsets = [0, 96], sizes = [2, 32], strides = [1, 1]} : vector<2x128xf32> to vector<2x32xf32>
    %184 = arith.negf %183 : vector<2x32xf32>
    %185 = math.exp %184 : vector<2x32xf32>
    %cst_98 = arith.constant 1.000000e+00 : f32
    %186 = vector.broadcast %cst_98 : f32 to vector<2x32xf32>
    %187 = arith.addf %186, %185 : vector<2x32xf32>
    %188 = arith.divf %186, %187 : vector<2x32xf32>
    %189 = arith.mulf %180, %168 : vector<2x32xf32>
    %190 = arith.mulf %174, %182 : vector<2x32xf32>
    %191 = arith.addf %189, %190 : vector<2x32xf32>
    %192 = math.tanh %191 : vector<2x32xf32>
    %193 = arith.mulf %188, %192 : vector<2x32xf32>
    %c0_99 = arith.constant 0 : index
    %c0_100 = arith.constant 0 : index
    %194 = vector.load %arg11[%c0_99, %c0_100] : memref<2x32xf32, #tpu.memory_space<vmem>>, vector<2x32xf32>
    tpu.vector_store %arg11[%c0_99, %c0_100], %193 {strides = array<i32>} : memref<2x32xf32, #tpu.memory_space<vmem>>, vector<2x32xf32>,
    %c0_101 = arith.constant 0 : index
    %c0_102 = arith.constant 0 : index
    %195 = vector.load %arg12[%c0_101, %c0_102] : memref<2x32xf32, #tpu.memory_space<vmem>>, vector<2x32xf32>
    tpu.vector_store %arg12[%c0_101, %c0_102], %191 {strides = array<i32>} : memref<2x32xf32, #tpu.memory_space<vmem>>, vector<2x32xf32>,
    %c5_i32 = arith.constant 5 : i32
    %c1_i32_103 = arith.constant 1 : i32
    %196 = arith.muli %c5_i32, %c1_i32_103 : i32
    %c0_i32_104 = arith.constant 0 : i32
    %197 = arith.addi %c0_i32_104, %196 : i32
    %c2_i32_105 = arith.constant 2 : i32
    %198 = arith.muli %197, %c2_i32_105 : i32
    %199 = arith.index_cast %198 : i32 to index
    %c0_106 = arith.constant 0 : index
    %200 = vector.load %arg10[%199, %c0_106] : memref<16x128xf32, #tpu.memory_space<vmem>>, vector<2x128xf32>
    %c0_107 = arith.constant 0 : index
    %c0_108 = arith.constant 0 : index
    %201 = vector.load %arg11[%c0_107, %c0_108] : memref<2x32xf32, #tpu.memory_space<vmem>>, vector<2x32xf32>
    %c0_109 = arith.constant 0 : index
    %c0_110 = arith.constant 0 : index
    %202 = vector.load %arg2[%c0_109, %c0_110] : memref<32x128xf32, #tpu.memory_space<vmem>>, vector<32x128xf32>
    %cst_111 = arith.constant dense<0.000000e+00> : vector<2x128xf32>
    %203 = tpu.matmul %201, %202, %cst_111 {dimension_numbers = #tpu.dot_dimension_numbers<[1], [0], [0], [1], [0, 0, 1, 1], [], []>} : vector<2x32xf32>, vector<32x128xf32>, vector<2x128xf32> -> vector<2x128xf32>
    %204 = arith.addf %200, %203 : vector<2x128xf32>
    %c0_112 = arith.constant 0 : index
    %c0_113 = arith.constant 0 : index
    %205 = vector.load %arg12[%c0_112, %c0_113] : memref<2x32xf32, #tpu.memory_space<vmem>>, vector<2x32xf32>
    %206 = vector.extract_strided_slice %204 {offsets = [0, 0], sizes = [2, 32], strides = [1, 1]} : vector<2x128xf32> to vector<2x32xf32>
    %207 = arith.negf %206 : vector<2x32xf32>
    %208 = math.exp %207 : vector<2x32xf32>
    %cst_114 = arith.constant 1.000000e+00 : f32
    %209 = vector.broadcast %cst_114 : f32 to vector<2x32xf32>
    %210 = arith.addf %209, %208 : vector<2x32xf32>
    %211 = arith.divf %209, %210 : vector<2x32xf32>
    %212 = vector.extract_strided_slice %204 {offsets = [0, 32], sizes = [2, 32], strides = [1, 1]} : vector<2x128xf32> to vector<2x32xf32>
    %213 = arith.negf %212 : vector<2x32xf32>
    %214 = math.exp %213 : vector<2x32xf32>
    %cst_115 = arith.constant 1.000000e+00 : f32
    %215 = vector.broadcast %cst_115 : f32 to vector<2x32xf32>
    %216 = arith.addf %215, %214 : vector<2x32xf32>
    %217 = arith.divf %215, %216 : vector<2x32xf32>
    %218 = vector.extract_strided_slice %204 {offsets = [0, 64], sizes = [2, 32], strides = [1, 1]} : vector<2x128xf32> to vector<2x32xf32>
    %219 = math.tanh %218 : vector<2x32xf32>
    %220 = vector.extract_strided_slice %204 {offsets = [0, 96], sizes = [2, 32], strides = [1, 1]} : vector<2x128xf32> to vector<2x32xf32>
    %221 = arith.negf %220 : vector<2x32xf32>
    %222 = math.exp %221 : vector<2x32xf32>
    %cst_116 = arith.constant 1.000000e+00 : f32
    %223 = vector.broadcast %cst_116 : f32 to vector<2x32xf32>
    %224 = arith.addf %223, %222 : vector<2x32xf32>
    %225 = arith.divf %223, %224 : vector<2x32xf32>
    %226 = arith.mulf %217, %205 : vector<2x32xf32>
    %227 = arith.mulf %211, %219 : vector<2x32xf32>
    %228 = arith.addf %226, %227 : vector<2x32xf32>
    %229 = math.tanh %228 : vector<2x32xf32>
    %230 = arith.mulf %225, %229 : vector<2x32xf32>
    %c0_117 = arith.constant 0 : index
    %c0_118 = arith.constant 0 : index
    %231 = vector.load %arg11[%c0_117, %c0_118] : memref<2x32xf32, #tpu.memory_space<vmem>>, vector<2x32xf32>
    tpu.vector_store %arg11[%c0_117, %c0_118], %230 {strides = array<i32>} : memref<2x32xf32, #tpu.memory_space<vmem>>, vector<2x32xf32>,
    %c0_119 = arith.constant 0 : index
    %c0_120 = arith.constant 0 : index
    %232 = vector.load %arg12[%c0_119, %c0_120] : memref<2x32xf32, #tpu.memory_space<vmem>>, vector<2x32xf32>
    tpu.vector_store %arg12[%c0_119, %c0_120], %228 {strides = array<i32>} : memref<2x32xf32, #tpu.memory_space<vmem>>, vector<2x32xf32>,
    %c6_i32 = arith.constant 6 : i32
    %c1_i32_121 = arith.constant 1 : i32
    %233 = arith.muli %c6_i32, %c1_i32_121 : i32
    %c0_i32_122 = arith.constant 0 : i32
    %234 = arith.addi %c0_i32_122, %233 : i32
    %c2_i32_123 = arith.constant 2 : i32
    %235 = arith.muli %234, %c2_i32_123 : i32
    %236 = arith.index_cast %235 : i32 to index
    %c0_124 = arith.constant 0 : index
    %237 = vector.load %arg10[%236, %c0_124] : memref<16x128xf32, #tpu.memory_space<vmem>>, vector<2x128xf32>
    %c0_125 = arith.constant 0 : index
    %c0_126 = arith.constant 0 : index
    %238 = vector.load %arg11[%c0_125, %c0_126] : memref<2x32xf32, #tpu.memory_space<vmem>>, vector<2x32xf32>
    %c0_127 = arith.constant 0 : index
    %c0_128 = arith.constant 0 : index
    %239 = vector.load %arg2[%c0_127, %c0_128] : memref<32x128xf32, #tpu.memory_space<vmem>>, vector<32x128xf32>
    %cst_129 = arith.constant dense<0.000000e+00> : vector<2x128xf32>
    %240 = tpu.matmul %238, %239, %cst_129 {dimension_numbers = #tpu.dot_dimension_numbers<[1], [0], [0], [1], [0, 0, 1, 1], [], []>} : vector<2x32xf32>, vector<32x128xf32>, vector<2x128xf32> -> vector<2x128xf32>
    %241 = arith.addf %237, %240 : vector<2x128xf32>
    %c0_130 = arith.constant 0 : index
    %c0_131 = arith.constant 0 : index
    %242 = vector.load %arg12[%c0_130, %c0_131] : memref<2x32xf32, #tpu.memory_space<vmem>>, vector<2x32xf32>
    %243 = vector.extract_strided_slice %241 {offsets = [0, 0], sizes = [2, 32], strides = [1, 1]} : vector<2x128xf32> to vector<2x32xf32>
    %244 = arith.negf %243 : vector<2x32xf32>
    %245 = math.exp %244 : vector<2x32xf32>
    %cst_132 = arith.constant 1.000000e+00 : f32
    %246 = vector.broadcast %cst_132 : f32 to vector<2x32xf32>
    %247 = arith.addf %246, %245 : vector<2x32xf32>
    %248 = arith.divf %246, %247 : vector<2x32xf32>
    %249 = vector.extract_strided_slice %241 {offsets = [0, 32], sizes = [2, 32], strides = [1, 1]} : vector<2x128xf32> to vector<2x32xf32>
    %250 = arith.negf %249 : vector<2x32xf32>
    %251 = math.exp %250 : vector<2x32xf32>
    %cst_133 = arith.constant 1.000000e+00 : f32
    %252 = vector.broadcast %cst_133 : f32 to vector<2x32xf32>
    %253 = arith.addf %252, %251 : vector<2x32xf32>
    %254 = arith.divf %252, %253 : vector<2x32xf32>
    %255 = vector.extract_strided_slice %241 {offsets = [0, 64], sizes = [2, 32], strides = [1, 1]} : vector<2x128xf32> to vector<2x32xf32>
    %256 = math.tanh %255 : vector<2x32xf32>
    %257 = vector.extract_strided_slice %241 {offsets = [0, 96], sizes = [2, 32], strides = [1, 1]} : vector<2x128xf32> to vector<2x32xf32>
    %258 = arith.negf %257 : vector<2x32xf32>
    %259 = math.exp %258 : vector<2x32xf32>
    %cst_134 = arith.constant 1.000000e+00 : f32
    %260 = vector.broadcast %cst_134 : f32 to vector<2x32xf32>
    %261 = arith.addf %260, %259 : vector<2x32xf32>
    %262 = arith.divf %260, %261 : vector<2x32xf32>
    %263 = arith.mulf %254, %242 : vector<2x32xf32>
    %264 = arith.mulf %248, %256 : vector<2x32xf32>
    %265 = arith.addf %263, %264 : vector<2x32xf32>
    %266 = math.tanh %265 : vector<2x32xf32>
    %267 = arith.mulf %262, %266 : vector<2x32xf32>
    %c0_135 = arith.constant 0 : index
    %c0_136 = arith.constant 0 : index
    %268 = vector.load %arg11[%c0_135, %c0_136] : memref<2x32xf32, #tpu.memory_space<vmem>>, vector<2x32xf32>
    tpu.vector_store %arg11[%c0_135, %c0_136], %267 {strides = array<i32>} : memref<2x32xf32, #tpu.memory_space<vmem>>, vector<2x32xf32>,
    %c0_137 = arith.constant 0 : index
    %c0_138 = arith.constant 0 : index
    %269 = vector.load %arg12[%c0_137, %c0_138] : memref<2x32xf32, #tpu.memory_space<vmem>>, vector<2x32xf32>
    tpu.vector_store %arg12[%c0_137, %c0_138], %265 {strides = array<i32>} : memref<2x32xf32, #tpu.memory_space<vmem>>, vector<2x32xf32>,
    %c7_i32 = arith.constant 7 : i32
    %c1_i32_139 = arith.constant 1 : i32
    %270 = arith.muli %c7_i32, %c1_i32_139 : i32
    %c0_i32_140 = arith.constant 0 : i32
    %271 = arith.addi %c0_i32_140, %270 : i32
    %c2_i32_141 = arith.constant 2 : i32
    %272 = arith.muli %271, %c2_i32_141 : i32
    %273 = arith.index_cast %272 : i32 to index
    %c0_142 = arith.constant 0 : index
    %274 = vector.load %arg10[%273, %c0_142] : memref<16x128xf32, #tpu.memory_space<vmem>>, vector<2x128xf32>
    %c0_143 = arith.constant 0 : index
    %c0_144 = arith.constant 0 : index
    %275 = vector.load %arg11[%c0_143, %c0_144] : memref<2x32xf32, #tpu.memory_space<vmem>>, vector<2x32xf32>
    %c0_145 = arith.constant 0 : index
    %c0_146 = arith.constant 0 : index
    %276 = vector.load %arg2[%c0_145, %c0_146] : memref<32x128xf32, #tpu.memory_space<vmem>>, vector<32x128xf32>
    %cst_147 = arith.constant dense<0.000000e+00> : vector<2x128xf32>
    %277 = tpu.matmul %275, %276, %cst_147 {dimension_numbers = #tpu.dot_dimension_numbers<[1], [0], [0], [1], [0, 0, 1, 1], [], []>} : vector<2x32xf32>, vector<32x128xf32>, vector<2x128xf32> -> vector<2x128xf32>
    %278 = arith.addf %274, %277 : vector<2x128xf32>
    %c0_148 = arith.constant 0 : index
    %c0_149 = arith.constant 0 : index
    %279 = vector.load %arg12[%c0_148, %c0_149] : memref<2x32xf32, #tpu.memory_space<vmem>>, vector<2x32xf32>
    %280 = vector.extract_strided_slice %278 {offsets = [0, 0], sizes = [2, 32], strides = [1, 1]} : vector<2x128xf32> to vector<2x32xf32>
    %281 = arith.negf %280 : vector<2x32xf32>
    %282 = math.exp %281 : vector<2x32xf32>
    %cst_150 = arith.constant 1.000000e+00 : f32
    %283 = vector.broadcast %cst_150 : f32 to vector<2x32xf32>
    %284 = arith.addf %283, %282 : vector<2x32xf32>
    %285 = arith.divf %283, %284 : vector<2x32xf32>
    %286 = vector.extract_strided_slice %278 {offsets = [0, 32], sizes = [2, 32], strides = [1, 1]} : vector<2x128xf32> to vector<2x32xf32>
    %287 = arith.negf %286 : vector<2x32xf32>
    %288 = math.exp %287 : vector<2x32xf32>
    %cst_151 = arith.constant 1.000000e+00 : f32
    %289 = vector.broadcast %cst_151 : f32 to vector<2x32xf32>
    %290 = arith.addf %289, %288 : vector<2x32xf32>
    %291 = arith.divf %289, %290 : vector<2x32xf32>
    %292 = vector.extract_strided_slice %278 {offsets = [0, 64], sizes = [2, 32], strides = [1, 1]} : vector<2x128xf32> to vector<2x32xf32>
    %293 = math.tanh %292 : vector<2x32xf32>
    %294 = vector.extract_strided_slice %278 {offsets = [0, 96], sizes = [2, 32], strides = [1, 1]} : vector<2x128xf32> to vector<2x32xf32>
    %295 = arith.negf %294 : vector<2x32xf32>
    %296 = math.exp %295 : vector<2x32xf32>
    %cst_152 = arith.constant 1.000000e+00 : f32
    %297 = vector.broadcast %cst_152 : f32 to vector<2x32xf32>
    %298 = arith.addf %297, %296 : vector<2x32xf32>
    %299 = arith.divf %297, %298 : vector<2x32xf32>
    %300 = arith.mulf %291, %279 : vector<2x32xf32>
    %301 = arith.mulf %285, %293 : vector<2x32xf32>
    %302 = arith.addf %300, %301 : vector<2x32xf32>
    %303 = math.tanh %302 : vector<2x32xf32>
    %304 = arith.mulf %299, %303 : vector<2x32xf32>
    %c0_153 = arith.constant 0 : index
    %c0_154 = arith.constant 0 : index
    %305 = vector.load %arg11[%c0_153, %c0_154] : memref<2x32xf32, #tpu.memory_space<vmem>>, vector<2x32xf32>
    tpu.vector_store %arg11[%c0_153, %c0_154], %304 {strides = array<i32>} : memref<2x32xf32, #tpu.memory_space<vmem>>, vector<2x32xf32>,
    %c0_155 = arith.constant 0 : index
    %c0_156 = arith.constant 0 : index
    %306 = vector.load %arg12[%c0_155, %c0_156] : memref<2x32xf32, #tpu.memory_space<vmem>>, vector<2x32xf32>
    tpu.vector_store %arg12[%c0_155, %c0_156], %302 {strides = array<i32>} : memref<2x32xf32, #tpu.memory_space<vmem>>, vector<2x32xf32>,
    %c8_i32 = arith.constant 8 : i32
    %c0_157 = arith.constant 0 : index
    %c0_158 = arith.constant 0 : index
    %307 = vector.load %arg11[%c0_157, %c0_158] : memref<2x32xf32, #tpu.memory_space<vmem>>, vector<2x32xf32>
    %c14 = arith.constant 14 : index
    %c0_159 = arith.constant 0 : index
    %308 = vector.load %arg0[%c14, %c0_159] : memref<16x32xf32, #tpu.memory_space<vmem>>, vector<2x32xf32>
    %c0_160 = arith.constant 0 : index
    %c0_161 = arith.constant 0 : index
    %309 = vector.load %arg4[%c0_160, %c0_161] : memref<32x128xf32, #tpu.memory_space<vmem>>, vector<32x128xf32>
    %cst_162 = arith.constant dense<0.000000e+00> : vector<2x128xf32>
    %310 = tpu.matmul %308, %309, %cst_162 {dimension_numbers = #tpu.dot_dimension_numbers<[1], [0], [0], [1], [0, 0, 1, 1], [], []>} : vector<2x32xf32>, vector<32x128xf32>, vector<2x128xf32> -> vector<2x128xf32>
    %c0_163 = arith.constant 0 : index
    %c0_164 = arith.constant 0 : index
    %311 = vector.load %arg5[%c0_163, %c0_164] : memref<1x128xf32, #tpu.memory_space<vmem>>, vector<1x128xf32>
    %312 = vector.broadcast %311 : vector<1x128xf32> to vector<2x128xf32>
    %313 = arith.addf %310, %312 : vector<2x128xf32>
    %cst_165 = arith.constant 0.000000e+00 : f32
    %314 = vector.broadcast %cst_165 : f32 to vector<2x32xf32>
    %315 = vector.extract_strided_slice %313 {offsets = [0, 0], sizes = [2, 32], strides = [1, 1]} : vector<2x128xf32> to vector<2x32xf32>
    %316 = arith.negf %315 : vector<2x32xf32>
    %317 = math.exp %316 : vector<2x32xf32>
    %cst_166 = arith.constant 1.000000e+00 : f32
    %318 = vector.broadcast %cst_166 : f32 to vector<2x32xf32>
    %319 = arith.addf %318, %317 : vector<2x32xf32>
    %320 = arith.divf %318, %319 : vector<2x32xf32>
    %321 = vector.extract_strided_slice %313 {offsets = [0, 32], sizes = [2, 32], strides = [1, 1]} : vector<2x128xf32> to vector<2x32xf32>
    %322 = arith.negf %321 : vector<2x32xf32>
    %323 = math.exp %322 : vector<2x32xf32>
    %cst_167 = arith.constant 1.000000e+00 : f32
    %324 = vector.broadcast %cst_167 : f32 to vector<2x32xf32>
    %325 = arith.addf %324, %323 : vector<2x32xf32>
    %326 = arith.divf %324, %325 : vector<2x32xf32>
    %327 = vector.extract_strided_slice %313 {offsets = [0, 64], sizes = [2, 32], strides = [1, 1]} : vector<2x128xf32> to vector<2x32xf32>
    %328 = math.tanh %327 : vector<2x32xf32>
    %329 = vector.extract_strided_slice %313 {offsets = [0, 96], sizes = [2, 32], strides = [1, 1]} : vector<2x128xf32> to vector<2x32xf32>
    %330 = arith.negf %329 : vector<2x32xf32>
    %331 = math.exp %330 : vector<2x32xf32>
    %cst_168 = arith.constant 1.000000e+00 : f32
    %332 = vector.broadcast %cst_168 : f32 to vector<2x32xf32>
    %333 = arith.addf %332, %331 : vector<2x32xf32>
    %334 = arith.divf %332, %333 : vector<2x32xf32>
    %335 = arith.mulf %326, %314 : vector<2x32xf32>
    %336 = arith.mulf %320, %328 : vector<2x32xf32>
    %337 = arith.addf %335, %336 : vector<2x32xf32>
    %338 = math.tanh %337 : vector<2x32xf32>
    %339 = arith.mulf %334, %338 : vector<2x32xf32>
    %c0_169 = arith.constant 0 : index
    %c0_170 = arith.constant 0 : index
    %340 = vector.load %arg6[%c0_169, %c0_170] : memref<32x4xf32, #tpu.memory_space<vmem>>, vector<32x4xf32>
    %cst_171 = arith.constant dense<0.000000e+00> : vector<2x4xf32>
    %341 = tpu.matmul %307, %340, %cst_171 {dimension_numbers = #tpu.dot_dimension_numbers<[1], [0], [0], [1], [0, 0, 1, 1], [], []>} : vector<2x32xf32>, vector<32x4xf32>, vector<2x4xf32> -> vector<2x4xf32>
    %c0_172 = arith.constant 0 : index
    %c0_173 = arith.constant 0 : index
    %342 = vector.load %arg7[%c0_172, %c0_173] : memref<32x4xf32, #tpu.memory_space<vmem>>, vector<32x4xf32>
    %cst_174 = arith.constant dense<0.000000e+00> : vector<2x4xf32>
    %343 = tpu.matmul %339, %342, %cst_174 {dimension_numbers = #tpu.dot_dimension_numbers<[1], [0], [0], [1], [0, 0, 1, 1], [], []>} : vector<2x32xf32>, vector<32x4xf32>, vector<2x4xf32> -> vector<2x4xf32>
    %344 = arith.addf %341, %343 : vector<2x4xf32>
    %c0_175 = arith.constant 0 : index
    %c0_176 = arith.constant 0 : index
    %345 = vector.load %arg8[%c0_175, %c0_176] : memref<1x4xf32, #tpu.memory_space<vmem>>, vector<1x4xf32>
    %346 = vector.broadcast %345 : vector<1x4xf32> to vector<2x4xf32>
    %347 = arith.addf %344, %346 : vector<2x4xf32>
    %c0_177 = arith.constant 0 : index
    %c0_178 = arith.constant 0 : index
    %348 = vector.load %arg9[%c0_177, %c0_178] : memref<2x4xf32, #tpu.memory_space<vmem>>, vector<2x4xf32>
    tpu.vector_store %arg9[%c0_177, %c0_178], %347 {strides = array<i32>} : memref<2x4xf32, #tpu.memory_space<vmem>>, vector<2x4xf32>,
    return
  }
}

</mosaic_0001>

<llo_original>
// kernel: tpu_custom_call.1
$region0: #{tpu_custom_call.1}
  #allocation0 [shape = 'u32[]', space=smem, size = 0x4, offset = 0x4, fixed_abs, tag = 'smem constant byte address 0x4 - core index']
  #allocation1 [shape = 'u32[144,128]{1,0:T(1,128)}', space=vmem, size = 0x12000, scoped, tag = 'internal scratch']
  #allocation2 [shape = 'f32[16,128]{1,0:T(8,128)}', space=vmem, size = 0x2000, scoped, tag = 'scratch operand']
  #allocation3 [shape = 'f32[2,32]{1,0:T(2,128)}', space=vmem, size = 0x400, scoped, tag = 'scratch operand']
  #allocation4 [shape = 'f32[2,32]{1,0:T(2,128)}', space=vmem, size = 0x400, scoped, tag = 'scratch operand']
  %s0 = inlined_call_operand.hbm [shape: f32[16,32], index: 0, kind: input, shape index: {}]
  %s1 = inlined_call_operand.vmem [shape: f32[32,128], index: 1, kind: input, shape index: {}]
  %s2 = inlined_call_operand.vmem [shape: f32[32,128], index: 2, kind: input, shape index: {}]
  %s3 = inlined_call_operand.vmem [shape: f32[1,128], index: 3, kind: input, shape index: {}]
  %s4 = inlined_call_operand.hbm [shape: f32[32,128], index: 4, kind: input, shape index: {}]
  %s5 = inlined_call_operand.vmem [shape: f32[1,128], index: 5, kind: input, shape index: {}]
  %s6 = inlined_call_operand.vmem [shape: f32[32,4], index: 6, kind: input, shape index: {}]
  %s7 = inlined_call_operand.vmem [shape: f32[32,4], index: 7, kind: input, shape index: {}]
  %s8 = inlined_call_operand.vmem [shape: f32[1,4], index: 8, kind: input, shape index: {}]
  %s9 = inlined_call_operand.hbm [shape: f32[2,4], index: 9, kind: output, shape index: {}]
  %s10 = sld [smem:[#allocation0]]
  $region54: #{tpu_custom_call.1} parent=0
    _
  %s12 = ssub.s32 1, %s10
  %s13 = scalar_select 0, %s12, %s10
  $region1: #{tpu_custom_call.1} parent=0
    #allocation5 [shape = 'u8[8192]{0}', space=vmem, size = 0x2000, scoped, tag = 'input window, operand 0, single buffered']
    #allocation6 [shape = 's32[1]{0}', space=sflag, size = 0x4, scoped, tag = 'scoped memory for tpu_custom_call.1']
    #allocation7 [shape = 's32[1]{0}', space=sflag, size = 0x4, scoped, tag = 'scoped memory for tpu_custom_call.1']
    #allocation8 [shape = 'u8[16384]{0}', space=vmem, size = 0x4000, scoped, tag = 'input window, operand 4, single buffered']
    #allocation9 [shape = 's32[1]{0}', space=sflag, size = 0x4, scoped, tag = 'scoped memory for tpu_custom_call.1']
    #allocation10 [shape = 'u8[1024]{0}', space=vmem, size = 0x400, scoped, tag = 'output window, operand 0, single buffered']
    %14 = vsyncpa [#allocation6], 0
    %15 = vsyncpa [#allocation9], 0
    %16 = vsyncpa [#allocation7], 0
    // Predicated region
    $region2: #{tpu_custom_call.1} parent=1 // pred_check
      _
    $region3: #{tpu_custom_call.1} parent=1 // pred_check_branch
      %18 = sbr.rel (0) target = $region5
    $region4: #{tpu_custom_call.1} parent=1 // pred_region
      %s20 = ssub.s32 256, 256
      %21 = vsyncadd [#allocation6], %s20
      %s22 = sshll.u32 [#allocation5], 4
      %s23 = int_to_ptr.vmem [resolvable:$true] %s22
      %28 = dma.hbm_to_vmem [thread:$0]  %s0, 256, %s23, [#allocation6], 128, 128, 8
    $region5: #{tpu_custom_call.1} parent=1 // pred_fallthru
      _
    // Predicated region
    $region6: #{tpu_custom_call.1} parent=1 // pred_check
      _
    $region7: #{tpu_custom_call.1} parent=1 // pred_check_branch
      %30 = sbr.rel (0) target = $region9
    $region8: #{tpu_custom_call.1} parent=1 // pred_region
      _
    $region9: #{tpu_custom_call.1} parent=1 // pred_fallthru
      _
    // Predicated region
    $region10: #{tpu_custom_call.1} parent=1 // pred_check
      _
    $region11: #{tpu_custom_call.1} parent=1 // pred_check_branch
      %32 = sbr.rel (0) target = $region13
    $region12: #{tpu_custom_call.1} parent=1 // pred_region
      _
    $region13: #{tpu_custom_call.1} parent=1 // pred_fallthru
      _
    // Predicated region
    $region14: #{tpu_custom_call.1} parent=1 // pred_check
      _
    $region15: #{tpu_custom_call.1} parent=1 // pred_check_branch
      %34 = sbr.rel (0) target = $region17
    $region16: #{tpu_custom_call.1} parent=1 // pred_region
      _
    $region17: #{tpu_custom_call.1} parent=1 // pred_fallthru
      _
    // Predicated region
    $region18: #{tpu_custom_call.1} parent=1 // pred_check
      _
    $region19: #{tpu_custom_call.1} parent=1 // pred_check_branch
      %36 = sbr.rel (0) target = $region21
    $region20: #{tpu_custom_call.1} parent=1 // pred_region
      %s38 = ssub.s32 512, 512
      %39 = vsyncadd [#allocation9], %s38
      %s40 = sshll.u32 [#allocation8], 4
      %s41 = int_to_ptr.vmem [resolvable:$true] %s40
      %46 = dma.hbm_to_vmem [thread:$0]  %s4, 512, %s41, [#allocation9], 128, 128, 8
    $region21: #{tpu_custom_call.1} parent=1 // pred_fallthru
      _
    // Predicated region
    $region22: #{tpu_custom_call.1} parent=1 // pred_check
      _
    $region23: #{tpu_custom_call.1} parent=1 // pred_check_branch
      %48 = sbr.rel (0) target = $region25
    $region24: #{tpu_custom_call.1} parent=1 // pred_region
      _
    $region25: #{tpu_custom_call.1} parent=1 // pred_fallthru
      _
    // Predicated region
    $region26: #{tpu_custom_call.1} parent=1 // pred_check
      _
    $region27: #{tpu_custom_call.1} parent=1 // pred_check_branch
      %50 = sbr.rel (0) target = $region29
    $region28: #{tpu_custom_call.1} parent=1 // pred_region
      _
    $region29: #{tpu_custom_call.1} parent=1 // pred_fallthru
      _
    // Predicated region
    $region30: #{tpu_custom_call.1} parent=1 // pred_check
      _
    $region31: #{tpu_custom_call.1} parent=1 // pred_check_branch
      %52 = sbr.rel (0) target = $region33
    $region32: #{tpu_custom_call.1} parent=1 // pred_region
      _
    $region33: #{tpu_custom_call.1} parent=1 // pred_fallthru
      _
    // Predicated region
    $region34: #{tpu_custom_call.1} parent=1 // pred_check
      _
    $region35: #{tpu_custom_call.1} parent=1 // pred_check_branch
      %54 = sbr.rel (0) target = $region37
    $region36: #{tpu_custom_call.1} parent=1 // pred_region
      _
    $region37: #{tpu_custom_call.1} parent=1 // pred_fallthru
      _
    // Predicated region
    $region38: #{tpu_custom_call.1} parent=1 // pred_check
      _
    $region39: #{tpu_custom_call.1} parent=1 // pred_check_branch
      %56 = sbr.rel (0) target = $region41
    $region40: #{tpu_custom_call.1} parent=1 // pred_region
      %57 = dma.done [#allocation6], 256
    $region41: #{tpu_custom_call.1} parent=1 // pred_fallthru
      _
    // Predicated region
    $region42: #{tpu_custom_call.1} parent=1 // pred_check
      _
    $region43: #{tpu_custom_call.1} parent=1 // pred_check_branch
      %59 = sbr.rel (0) target = $region45
    $region44: #{tpu_custom_call.1} parent=1 // pred_region
      %60 = dma.done [#allocation9], 512
    $region45: #{tpu_custom_call.1} parent=1 // pred_fallthru
      _
    %v61 = vld [vmem:[#allocation5] sm:$0xff]
    %v62 = vld [vmem:[#allocation5 + $0x8] sm:$0xff]
    %v63 = vld [vmem:[%s1] sm:$0xff]
    %v64 = vld [vmem:[%s1 + $0x8] sm:$0xff]
    %v65 = vld [vmem:[%s1 + $0x10] sm:$0xff]
    %v66 = vld [vmem:[%s1 + $0x18] sm:$0xff]
    %v67 = vld [vmem:[%s3] sm:$0x1]
    %v69 = vlaneseq
    %v70 = vshrl.u32 %v69, 7
    %v71 = vsub.s32 0, %v70
    %v72 = vrot.slane %v67, %v71
    %vm74 = vcmask 261120
    %v76 = vsel %vm74, %v61, 0
    %v79 = vsel %vm74, %v62, 0
    %81 = vmatprep.subr.mxu0 0.0
    %82 = vmatpush1.msra.mxu0 %v63
    %83 = vmatprep.subr.mxu0 0.0
    %84 = vmatpush1.msra.mxu0 %v64
    %85 = vmatprep.subr.mxu0 0.0
    %86 = vmatpush1.msra.mxu0 %v65
    %87 = vmatprep.subr.mxu0 0.0
    %88 = vmatpush1.msra.mxu0 %v66
    %89 = vmatprep.subr.mxu0 0.0
    %90 = vmatpush1.msra.mxu0 0.0
    %91 = vmatprep.subr.mxu0 0.0
    %92 = vmatpush1.msra.mxu0 0.0
    %93 = vmatprep.subr.mxu0 0.0
    %94 = vmatpush1.msra.mxu0 0.0
    %95 = vmatprep.subr.mxu0 0.0
    %96 = vmatpush1.msra.mxu0 0.0
    %97 = vmatprep.subr.mxu0 0.0
    %98 = vmatpush1.msra.mxu0 0.0
    %99 = vmatprep.subr.mxu0 0.0
    %100 = vmatpush1.msra.mxu0 0.0
    %101 = vmatprep.subr.mxu0 0.0
    %102 = vmatpush1.msra.mxu0 0.0
    %103 = vmatprep.subr.mxu0 0.0
    %104 = vmatpush1.msra.mxu0 0.0
    %105 = vmatprep.subr.mxu0 0.0
    %106 = vmatpush1.msra.mxu0 0.0
    %107 = vmatprep.subr.mxu0 0.0
    %108 = vmatpush1.msra.mxu0 0.0
    %109 = vmatprep.subr.mxu0 0.0
    %110 = vmatpush1.msra.mxu0 0.0
    %111 = vmatprep.subr.mxu0 0.0
    %112 = vmatpush1.msra.mxu0 0.0
    %113 = vmatprep.subr.mxu0 0.0
    %114 = vmatpush1.msra.mxu0 0.0
    %115 = vmatprep.subr.mxu0 0.0
    %116 = vmatpush1.msra.mxu0 0.0
    %117 = vmatprep.subr.mxu0 0.0
    %118 = vmatpush1.msra.mxu0 0.0
    %119 = vmatprep.subr.mxu0 0.0
    %120 = vmatpush1.msra.mxu0 0.0
    %121 = vmatprep.subr.mxu0 0.0
    %122 = vmatpush1.msra.mxu0 0.0
    %123 = vmatprep.subr.mxu0 0.0
    %124 = vmatpush1.msra.mxu0 0.0
    %125 = vmatprep.subr.mxu0 0.0
    %126 = vmatpush1.msra.mxu0 0.0
    %127 = vmatprep.subr.mxu0 0.0
    %128 = vmatpush1.msra.mxu0 0.0
    %129 = vmatprep.subr.mxu0 0.0
    %130 = vmatpush1.msra.mxu0 0.0
    %131 = vmatprep.subr.mxu0 0.0
    %132 = vmatpush1.msra.mxu0 0.0
    %133 = vmatprep.subr.mxu0 0.0
    %134 = vmatpush1.msra.mxu0 0.0
    %135 = vmatprep.subr.mxu0 0.0
    %136 = vmatpush1.msra.mxu0 0.0
    %137 = vmatprep.subr.mxu0 0.0
    %138 = vmatpush1.msra.mxu0 0.0
    %139 = vmatprep.subr.mxu0 0.0
    %140 = vmatpush1.msra.mxu0 0.0
    %141 = vmatprep.subr.mxu0 0.0
    %142 = vmatpush1.msra.mxu0 0.0
    %143 = vmatprep.subr.mxu0 0.0
    %144 = vmatpush1.msra.mxu0 0.0
    %145 = vmatprep.mubr.f32.mxu0 0.0
    %146 = vmatmul.mubr.f32.gmra.mrb[0].mxu0 %v76
    %v147 = vpop.f32.mrb[0].mxu0
    %v148 = vadd.f32 %v72, %v147
    %v149 = vpop.f32.mrb[0].mxu0
    %150 = vmatprep.mubr.f32.mxu0 0.0
    %151 = vmatmul.mubr.f32.gmra.mrb[0].mxu0 %v79
    %v152 = vpop.f32.mrb[0].mxu0
    %v153 = vadd.f32 %v72, %v152
    %v154 = vpop.f32.mrb[0].mxu0
    %155 = vdwg.mxu0
    %156 = vst [vmem:[#allocation2] sm:$0xff] %v148
    %157 = vst [vmem:[#allocation2 + $0x8] sm:$0xff] %v153
    %vm158 = vcmask 254976
    %159 = vst.msk [vmem:[#allocation3] sm:$0x3] %vm158, 0.0
    %160 = vst.msk [vmem:[#allocation4] sm:$0x3] %vm158, 0.0
    %v161 = vld [vmem:[#allocation2] sm:$0x3]
    %v162 = vld [vmem:[#allocation3] sm:$0x3]
    %v163 = vld [vmem:[%s2] sm:$0xff]
    %v164 = vld [vmem:[%s2 + $0x8] sm:$0xff]
    %v165 = vld [vmem:[%s2 + $0x10] sm:$0xff]
    %v166 = vld [vmem:[%s2 + $0x18] sm:$0xff]
    %v168 = vsel %vm74, %v162, 0
    %170 = vmatprep.subr.mxu0 0.0
    %171 = vmatpush1.msra.mxu0 %v163
    %172 = vmatprep.subr.mxu0 0.0
    %173 = vmatpush1.msra.mxu0 %v164
    %174 = vmatprep.subr.mxu0 0.0
    %175 = vmatpush1.msra.mxu0 %v165
    %176 = vmatprep.subr.mxu0 0.0
    %177 = vmatpush1.msra.mxu0 %v166
    %178 = vmatprep.subr.mxu0 0.0
    %179 = vmatpush1.msra.mxu0 0.0
    %180 = vmatprep.subr.mxu0 0.0
    %181 = vmatpush1.msra.mxu0 0.0
    %182 = vmatprep.subr.mxu0 0.0
    %183 = vmatpush1.msra.mxu0 0.0
    %184 = vmatprep.subr.mxu0 0.0
    %185 = vmatpush1.msra.mxu0 0.0
    %186 = vmatprep.subr.mxu0 0.0
    %187 = vmatpush1.msra.mxu0 0.0
    %188 = vmatprep.subr.mxu0 0.0
    %189 = vmatpush1.msra.mxu0 0.0
    %190 = vmatprep.subr.mxu0 0.0
    %191 = vmatpush1.msra.mxu0 0.0
    %192 = vmatprep.subr.mxu0 0.0
    %193 = vmatpush1.msra.mxu0 0.0
    %194 = vmatprep.subr.mxu0 0.0
    %195 = vmatpush1.msra.mxu0 0.0
    %196 = vmatprep.subr.mxu0 0.0
    %197 = vmatpush1.msra.mxu0 0.0
    %198 = vmatprep.subr.mxu0 0.0
    %199 = vmatpush1.msra.mxu0 0.0
    %200 = vmatprep.subr.mxu0 0.0
    %201 = vmatpush1.msra.mxu0 0.0
    %202 = vmatprep.subr.mxu0 0.0
    %203 = vmatpush1.msra.mxu0 0.0
    %204 = vmatprep.subr.mxu0 0.0
    %205 = vmatpush1.msra.mxu0 0.0
    %206 = vmatprep.subr.mxu0 0.0
    %207 = vmatpush1.msra.mxu0 0.0
    %208 = vmatprep.subr.mxu0 0.0
    %209 = vmatpush1.msra.mxu0 0.0
    %210 = vmatprep.subr.mxu0 0.0
    %211 = vmatpush1.msra.mxu0 0.0
    %212 = vmatprep.subr.mxu0 0.0
    %213 = vmatpush1.msra.mxu0 0.0
    %214 = vmatprep.subr.mxu0 0.0
    %215 = vmatpush1.msra.mxu0 0.0
    %216 = vmatprep.subr.mxu0 0.0
    %217 = vmatpush1.msra.mxu0 0.0
    %218 = vmatprep.subr.mxu0 0.0
    %219 = vmatpush1.msra.mxu0 0.0
    %220 = vmatprep.subr.mxu0 0.0
    %221 = vmatpush1.msra.mxu0 0.0
    %222 = vmatprep.subr.mxu0 0.0
    %223 = vmatpush1.msra.mxu0 0.0
    %224 = vmatprep.subr.mxu0 0.0
    %225 = vmatpush1.msra.mxu0 0.0
    %226 = vmatprep.subr.mxu0 0.0
    %227 = vmatpush1.msra.mxu0 0.0
    %228 = vmatprep.subr.mxu0 0.0
    %229 = vmatpush1.msra.mxu0 0.0
    %230 = vmatprep.subr.mxu0 0.0
    %231 = vmatpush1.msra.mxu0 0.0
    %232 = vmatprep.subr.mxu0 0.0
    %233 = vmatpush1.msra.mxu0 0.0
    %234 = vmatprep.mubr.f32.mxu0 0.0
    %235 = vmatmul.mubr.f32.gmra.mrb[0].mxu0 %v168
    %v236 = vpop.f32.mrb[0].mxu0
    %v237 = vadd.f32 0.0, %v236
    %v238 = vpop.f32.mrb[0].mxu0
    %239 = vdwg.mxu0
    %v240 = vadd.f32 %v161, %v237
    %v241 = vld [vmem:[#allocation4] sm:$0x3]
    %v242 = vxor.u32 %v240, 2147483648
    %v243 = vmul.f32 %v242, 1.442695
    %v244 = vpow.pop %v243
    %v245 = vadd.f32 %v244, 1.0
    %v246 = vrcp.pop %v245
    %v247 = vmul.f32 1.0, %v246
    %v248 = vtanh.pop %v240
    %250 = vrot.lane.b32.xlu0 %v241, 32
    %v251 = vpop.permute.xlu0 %250
    %v253 = vmul.f32 %v247, %v251
    %255 = vrot.lane.b32.xlu0 %v248, 64
    %v256 = vpop.permute.xlu0 %255
    %v258 = vmul.f32 %v247, %v256
    %260 = vrot.lane.b32.xlu0 %v258, 32
    %v261 = vpop.permute.xlu0 %260
    %v263 = vadd.f32 %v253, %v261
    %v264 = vtanh.pop %v263
    %266 = vrot.lane.b32.xlu0 %v264, 64
    %v267 = vpop.permute.xlu0 %266
    %v269 = vmul.f32 %v247, %v267
    %271 = vrot.lane.b32.xlu0 %v269, 32
    %v272 = vpop.permute.xlu0 %271
    %274 = vst.msk [vmem:[#allocation3] sm:$0x3] %vm158, %v272
    %276 = vrot.lane.b32.xlu0 %v263, 96
    %v277 = vpop.permute.xlu0 %276
    %279 = vst.msk [vmem:[#allocation4] sm:$0x3] %vm158, %v277
    %v280 = vld [vmem:[#allocation2 + $0x2] sm:$0x3]
    %v281 = vld [vmem:[#allocation3] sm:$0x3]
    %v282 = vld [vmem:[%s2] sm:$0xff]
    %v283 = vld [vmem:[%s2 + $0x8] sm:$0xff]
    %v284 = vld [vmem:[%s2 + $0x10] sm:$0xff]
    %v285 = vld [vmem:[%s2 + $0x18] sm:$0xff]
    %v287 = vsel %vm74, %v281, 0
    %289 = vmatprep.subr.mxu0 0.0
    %290 = vmatpush1.msra.mxu0 %v282
    %291 = vmatprep.subr.mxu0 0.0
    %292 = vmatpush1.msra.mxu0 %v283
    %293 = vmatprep.subr.mxu0 0.0
    %294 = vmatpush1.msra.mxu0 %v284
    %295 = vmatprep.subr.mxu0 0.0
    %296 = vmatpush1.msra.mxu0 %v285
    %297 = vmatprep.subr.mxu0 0.0
    %298 = vmatpush1.msra.mxu0 0.0
    %299 = vmatprep.subr.mxu0 0.0
    %300 = vmatpush1.msra.mxu0 0.0
    %301 = vmatprep.subr.mxu0 0.0
    %302 = vmatpush1.msra.mxu0 0.0
    %303 = vmatprep.subr.mxu0 0.0
    %304 = vmatpush1.msra.mxu0 0.0
    %305 = vmatprep.subr.mxu0 0.0
    %306 = vmatpush1.msra.mxu0 0.0
    %307 = vmatprep.subr.mxu0 0.0
    %308 = vmatpush1.msra.mxu0 0.0
    %309 = vmatprep.subr.mxu0 0.0
    %310 = vmatpush1.msra.mxu0 0.0
    %311 = vmatprep.subr.mxu0 0.0
    %312 = vmatpush1.msra.mxu0 0.0
    %313 = vmatprep.subr.mxu0 0.0
    %314 = vmatpush1.msra.mxu0 0.0
    %315 = vmatprep.subr.mxu0 0.0
    %316 = vmatpush1.msra.mxu0 0.0
    %317 = vmatprep.subr.mxu0 0.0
    %318 = vmatpush1.msra.mxu0 0.0
    %319 = vmatprep.subr.mxu0 0.0
    %320 = vmatpush1.msra.mxu0 0.0
    %321 = vmatprep.subr.mxu0 0.0
    %322 = vmatpush1.msra.mxu0 0.0
    %323 = vmatprep.subr.mxu0 0.0
    %324 = vmatpush1.msra.mxu0 0.0
    %325 = vmatprep.subr.mxu0 0.0
    %326 = vmatpush1.msra.mxu0 0.0
    %327 = vmatprep.subr.mxu0 0.0
    %328 = vmatpush1.msra.mxu0 0.0
    %329 = vmatprep.subr.mxu0 0.0
    %330 = vmatpush1.msra.mxu0 0.0
    %331 = vmatprep.subr.mxu0 0.0
    %332 = vmatpush1.msra.mxu0 0.0
    %333 = vmatprep.subr.mxu0 0.0
    %334 = vmatpush1.msra.mxu0 0.0
    %335 = vmatprep.subr.mxu0 0.0
    %336 = vmatpush1.msra.mxu0 0.0
    %337 = vmatprep.subr.mxu0 0.0
    %338 = vmatpush1.msra.mxu0 0.0
    %339 = vmatprep.subr.mxu0 0.0
    %340 = vmatpush1.msra.mxu0 0.0
    %341 = vmatprep.subr.mxu0 0.0
    %342 = vmatpush1.msra.mxu0 0.0
    %343 = vmatprep.subr.mxu0 0.0
    %344 = vmatpush1.msra.mxu0 0.0
    %345 = vmatprep.subr.mxu0 0.0
    %346 = vmatpush1.msra.mxu0 0.0
    %347 = vmatprep.subr.mxu0 0.0
    %348 = vmatpush1.msra.mxu0 0.0
    %349 = vmatprep.subr.mxu0 0.0
    %350 = vmatpush1.msra.mxu0 0.0
    %351 = vmatprep.subr.mxu0 0.0
    %352 = vmatpush1.msra.mxu0 0.0
    %353 = vmatprep.mubr.f32.mxu0 0.0
    %354 = vmatmul.mubr.f32.gmra.mrb[0].mxu0 %v287
    %v355 = vpop.f32.mrb[0].mxu0
    %v356 = vadd.f32 0.0, %v355
    %v357 = vpop.f32.mrb[0].mxu0
    %358 = vdwg.mxu0
    %v359 = vadd.f32 %v280, %v356
    %v360 = vld [vmem:[#allocation4] sm:$0x3]
    %v361 = vxor.u32 %v359, 2147483648
    %v362 = vmul.f32 %v361, 1.442695
    %v363 = vpow.pop %v362
    %v364 = vadd.f32 %v363, 1.0
    %v365 = vrcp.pop %v364
    %v366 = vmul.f32 1.0, %v365
    %v367 = vtanh.pop %v359
    %369 = vrot.lane.b32.xlu0 %v360, 32
    %v370 = vpop.permute.xlu0 %369
    %v372 = vmul.f32 %v366, %v370
    %374 = vrot.lane.b32.xlu0 %v367, 64
    %v375 = vpop.permute.xlu0 %374
    %v377 = vmul.f32 %v366, %v375
    %379 = vrot.lane.b32.xlu0 %v377, 32
    %v380 = vpop.permute.xlu0 %379
    %v382 = vadd.f32 %v372, %v380
    %v383 = vtanh.pop %v382
    %385 = vrot.lane.b32.xlu0 %v383, 64
    %v386 = vpop.permute.xlu0 %385
    %v388 = vmul.f32 %v366, %v386
    %390 = vrot.lane.b32.xlu0 %v388, 32
    %v391 = vpop.permute.xlu0 %390
    %393 = vst.msk [vmem:[#allocation3] sm:$0x3] %vm158, %v391
    %395 = vrot.lane.b32.xlu0 %v382, 96
    %v396 = vpop.permute.xlu0 %395
    %398 = vst.msk [vmem:[#allocation4] sm:$0x3] %vm158, %v396
    %v399 = vld [vmem:[#allocation2 + $0x4] sm:$0x3]
    %v400 = vld [vmem:[#allocation3] sm:$0x3]
    %v401 = vld [vmem:[%s2] sm:$0xff]
    %v402 = vld [vmem:[%s2 + $0x8] sm:$0xff]
    %v403 = vld [vmem:[%s2 + $0x10] sm:$0xff]
    %v404 = vld [vmem:[%s2 + $0x18] sm:$0xff]
    %v406 = vsel %vm74, %v400, 0
    %408 = vmatprep.subr.mxu0 0.0
    %409 = vmatpush1.msra.mxu0 %v401
    %410 = vmatprep.subr.mxu0 0.0
    %411 = vmatpush1.msra.mxu0 %v402
    %412 = vmatprep.subr.mxu0 0.0
    %413 = vmatpush1.msra.mxu0 %v403
    %414 = vmatprep.subr.mxu0 0.0
    %415 = vmatpush1.msra.mxu0 %v404
    %416 = vmatprep.subr.mxu0 0.0
    %417 = vmatpush1.msra.mxu0 0.0
    %418 = vmatprep.subr.mxu0 0.0
    %419 = vmatpush1.msra.mxu0 0.0
    %420 = vmatprep.subr.mxu0 0.0
    %421 = vmatpush1.msra.mxu0 0.0
    %422 = vmatprep.subr.mxu0 0.0
    %423 = vmatpush1.msra.mxu0 0.0
    %424 = vmatprep.subr.mxu0 0.0
    %425 = vmatpush1.msra.mxu0 0.0
    %426 = vmatprep.subr.mxu0 0.0
    %427 = vmatpush1.msra.mxu0 0.0
    %428 = vmatprep.subr.mxu0 0.0
    %429 = vmatpush1.msra.mxu0 0.0
    %430 = vmatprep.subr.mxu0 0.0
    %431 = vmatpush1.msra.mxu0 0.0
    %432 = vmatprep.subr.mxu0 0.0
    %433 = vmatpush1.msra.mxu0 0.0
    %434 = vmatprep.subr.mxu0 0.0
    %435 = vmatpush1.msra.mxu0 0.0
    %436 = vmatprep.subr.mxu0 0.0
    %437 = vmatpush1.msra.mxu0 0.0
    %438 = vmatprep.subr.mxu0 0.0
    %439 = vmatpush1.msra.mxu0 0.0
    %440 = vmatprep.subr.mxu0 0.0
    %441 = vmatpush1.msra.mxu0 0.0
    %442 = vmatprep.subr.mxu0 0.0
    %443 = vmatpush1.msra.mxu0 0.0
    %444 = vmatprep.subr.mxu0 0.0
    %445 = vmatpush1.msra.mxu0 0.0
    %446 = vmatprep.subr.mxu0 0.0
    %447 = vmatpush1.msra.mxu0 0.0
    %448 = vmatprep.subr.mxu0 0.0
    %449 = vmatpush1.msra.mxu0 0.0
    %450 = vmatprep.subr.mxu0 0.0
    %451 = vmatpush1.msra.mxu0 0.0
    %452 = vmatprep.subr.mxu0 0.0
    %453 = vmatpush1.msra.mxu0 0.0
    %454 = vmatprep.subr.mxu0 0.0
    %455 = vmatpush1.msra.mxu0 0.0
    %456 = vmatprep.subr.mxu0 0.0
    %457 = vmatpush1.msra.mxu0 0.0
    %458 = vmatprep.subr.mxu0 0.0
    %459 = vmatpush1.msra.mxu0 0.0
    %460 = vmatprep.subr.mxu0 0.0
    %461 = vmatpush1.msra.mxu0 0.0
    %462 = vmatprep.subr.mxu0 0.0
    %463 = vmatpush1.msra.mxu0 0.0
    %464 = vmatprep.subr.mxu0 0.0
    %465 = vmatpush1.msra.mxu0 0.0
    %466 = vmatprep.subr.mxu0 0.0
    %467 = vmatpush1.msra.mxu0 0.0
    %468 = vmatprep.subr.mxu0 0.0
    %469 = vmatpush1.msra.mxu0 0.0
    %470 = vmatprep.subr.mxu0 0.0
    %471 = vmatpush1.msra.mxu0 0.0
    %472 = vmatprep.mubr.f32.mxu0 0.0
    %473 = vmatmul.mubr.f32.gmra.mrb[0].mxu0 %v406
    %v474 = vpop.f32.mrb[0].mxu0
    %v475 = vadd.f32 0.0, %v474
    %v476 = vpop.f32.mrb[0].mxu0
    %477 = vdwg.mxu0
    %v478 = vadd.f32 %v399, %v475
    %v479 = vld [vmem:[#allocation4] sm:$0x3]
    %v480 = vxor.u32 %v478, 2147483648
    %v481 = vmul.f32 %v480, 1.442695
    %v482 = vpow.pop %v481
    %v483 = vadd.f32 %v482, 1.0
    %v484 = vrcp.pop %v483
    %v485 = vmul.f32 1.0, %v484
    %v486 = vtanh.pop %v478
    %488 = vrot.lane.b32.xlu0 %v479, 32
    %v489 = vpop.permute.xlu0 %488
    %v491 = vmul.f32 %v485, %v489
    %493 = vrot.lane.b32.xlu0 %v486, 64
    %v494 = vpop.permute.xlu0 %493
    %v496 = vmul.f32 %v485, %v494
    %498 = vrot.lane.b32.xlu0 %v496, 32
    %v499 = vpop.permute.xlu0 %498
    %v501 = vadd.f32 %v491, %v499
    %v502 = vtanh.pop %v501
    %504 = vrot.lane.b32.xlu0 %v502, 64
    %v505 = vpop.permute.xlu0 %504
    %v507 = vmul.f32 %v485, %v505
    %509 = vrot.lane.b32.xlu0 %v507, 32
    %v510 = vpop.permute.xlu0 %509
    %512 = vst.msk [vmem:[#allocation3] sm:$0x3] %vm158, %v510
    %514 = vrot.lane.b32.xlu0 %v501, 96
    %v515 = vpop.permute.xlu0 %514
    %517 = vst.msk [vmem:[#allocation4] sm:$0x3] %vm158, %v515
    %v518 = vld [vmem:[#allocation2 + $0x6] sm:$0x3]
    %v519 = vld [vmem:[#allocation3] sm:$0x3]
    %v520 = vld [vmem:[%s2] sm:$0xff]
    %v521 = vld [vmem:[%s2 + $0x8] sm:$0xff]
    %v522 = vld [vmem:[%s2 + $0x10] sm:$0xff]
    %v523 = vld [vmem:[%s2 + $0x18] sm:$0xff]
    %v525 = vsel %vm74, %v519, 0
    %527 = vmatprep.subr.mxu0 0.0
    %528 = vmatpush1.msra.mxu0 %v520
    %529 = vmatprep.subr.mxu0 0.0
    %530 = vmatpush1.msra.mxu0 %v521
    %531 = vmatprep.subr.mxu0 0.0
    %532 = vmatpush1.msra.mxu0 %v522
    %533 = vmatprep.subr.mxu0 0.0
    %534 = vmatpush1.msra.mxu0 %v523
    %535 = vmatprep.subr.mxu0 0.0
    %536 = vmatpush1.msra.mxu0 0.0
    %537 = vmatprep.subr.mxu0 0.0
    %538 = vmatpush1.msra.mxu0 0.0
    %539 = vmatprep.subr.mxu0 0.0
    %540 = vmatpush1.msra.mxu0 0.0
    %541 = vmatprep.subr.mxu0 0.0
    %542 = vmatpush1.msra.mxu0 0.0
    %543 = vmatprep.subr.mxu0 0.0
    %544 = vmatpush1.msra.mxu0 0.0
    %545 = vmatprep.subr.mxu0 0.0
    %546 = vmatpush1.msra.mxu0 0.0
    %547 = vmatprep.subr.mxu0 0.0
    %548 = vmatpush1.msra.mxu0 0.0
    %549 = vmatprep.subr.mxu0 0.0
    %550 = vmatpush1.msra.mxu0 0.0
    %551 = vmatprep.subr.mxu0 0.0
    %552 = vmatpush1.msra.mxu0 0.0
    %553 = vmatprep.subr.mxu0 0.0
    %554 = vmatpush1.msra.mxu0 0.0
    %555 = vmatprep.subr.mxu0 0.0
    %556 = vmatpush1.msra.mxu0 0.0
    %557 = vmatprep.subr.mxu0 0.0
    %558 = vmatpush1.msra.mxu0 0.0
    %559 = vmatprep.subr.mxu0 0.0
    %560 = vmatpush1.msra.mxu0 0.0
    %561 = vmatprep.subr.mxu0 0.0
    %562 = vmatpush1.msra.mxu0 0.0
    %563 = vmatprep.subr.mxu0 0.0
    %564 = vmatpush1.msra.mxu0 0.0
    %565 = vmatprep.subr.mxu0 0.0
    %566 = vmatpush1.msra.mxu0 0.0
    %567 = vmatprep.subr.mxu0 0.0
    %568 = vmatpush1.msra.mxu0 0.0
    %569 = vmatprep.subr.mxu0 0.0
    %570 = vmatpush1.msra.mxu0 0.0
    %571 = vmatprep.subr.mxu0 0.0
    %572 = vmatpush1.msra.mxu0 0.0
    %573 = vmatprep.subr.mxu0 0.0
    %574 = vmatpush1.msra.mxu0 0.0
    %575 = vmatprep.subr.mxu0 0.0
    %576 = vmatpush1.msra.mxu0 0.0
    %577 = vmatprep.subr.mxu0 0.0
    %578 = vmatpush1.msra.mxu0 0.0
    %579 = vmatprep.subr.mxu0 0.0
    %580 = vmatpush1.msra.mxu0 0.0
    %581 = vmatprep.subr.mxu0 0.0
    %582 = vmatpush1.msra.mxu0 0.0
    %583 = vmatprep.subr.mxu0 0.0
    %584 = vmatpush1.msra.mxu0 0.0
    %585 = vmatprep.subr.mxu0 0.0
    %586 = vmatpush1.msra.mxu0 0.0
    %587 = vmatprep.subr.mxu0 0.0
    %588 = vmatpush1.msra.mxu0 0.0
    %589 = vmatprep.subr.mxu0 0.0
    %590 = vmatpush1.msra.mxu0 0.0
    %591 = vmatprep.mubr.f32.mxu0 0.0
    %592 = vmatmul.mubr.f32.gmra.mrb[0].mxu0 %v525
    %v593 = vpop.f32.mrb[0].mxu0
    %v594 = vadd.f32 0.0, %v593
    %v595 = vpop.f32.mrb[0].mxu0
    %596 = vdwg.mxu0
    %v597 = vadd.f32 %v518, %v594
    %v598 = vld [vmem:[#allocation4] sm:$0x3]
    %v599 = vxor.u32 %v597, 2147483648
    %v600 = vmul.f32 %v599, 1.442695
    %v601 = vpow.pop %v600
    %v602 = vadd.f32 %v601, 1.0
    %v603 = vrcp.pop %v602
    %v604 = vmul.f32 1.0, %v603
    %v605 = vtanh.pop %v597
    %607 = vrot.lane.b32.xlu0 %v598, 32
    %v608 = vpop.permute.xlu0 %607
    %v610 = vmul.f32 %v604, %v608
    %612 = vrot.lane.b32.xlu0 %v605, 64
    %v613 = vpop.permute.xlu0 %612
    %v615 = vmul.f32 %v604, %v613
    %617 = vrot.lane.b32.xlu0 %v615, 32
    %v618 = vpop.permute.xlu0 %617
    %v620 = vadd.f32 %v610, %v618
    %v621 = vtanh.pop %v620
    %623 = vrot.lane.b32.xlu0 %v621, 64
    %v624 = vpop.permute.xlu0 %623
    %v626 = vmul.f32 %v604, %v624
    %628 = vrot.lane.b32.xlu0 %v626, 32
    %v629 = vpop.permute.xlu0 %628
    %631 = vst.msk [vmem:[#allocation3] sm:$0x3] %vm158, %v629
    %633 = vrot.lane.b32.xlu0 %v620, 96
    %v634 = vpop.permute.xlu0 %633
    %636 = vst.msk [vmem:[#allocation4] sm:$0x3] %vm158, %v634
    %v637 = vld [vmem:[#allocation2 + $0x8] sm:$0x3]
    %v638 = vld [vmem:[#allocation3] sm:$0x3]
    %v639 = vld [vmem:[%s2] sm:$0xff]
    %v640 = vld [vmem:[%s2 + $0x8] sm:$0xff]
    %v641 = vld [vmem:[%s2 + $0x10] sm:$0xff]
    %v642 = vld [vmem:[%s2 + $0x18] sm:$0xff]
    %v644 = vsel %vm74, %v638, 0
    %646 = vmatprep.subr.mxu0 0.0
    %647 = vmatpush1.msra.mxu0 %v639
    %648 = vmatprep.subr.mxu0 0.0
    %649 = vmatpush1.msra.mxu0 %v640
    %650 = vmatprep.subr.mxu0 0.0
    %651 = vmatpush1.msra.mxu0 %v641
    %652 = vmatprep.subr.mxu0 0.0
    %653 = vmatpush1.msra.mxu0 %v642
    %654 = vmatprep.subr.mxu0 0.0
    %655 = vmatpush1.msra.mxu0 0.0
    %656 = vmatprep.subr.mxu0 0.0
    %657 = vmatpush1.msra.mxu0 0.0
    %658 = vmatprep.subr.mxu0 0.0
    %659 = vmatpush1.msra.mxu0 0.0
    %660 = vmatprep.subr.mxu0 0.0
    %661 = vmatpush1.msra.mxu0 0.0
    %662 = vmatprep.subr.mxu0 0.0
    %663 = vmatpush1.msra.mxu0 0.0
    %664 = vmatprep.subr.mxu0 0.0
    %665 = vmatpush1.msra.mxu0 0.0
    %666 = vmatprep.subr.mxu0 0.0
    %667 = vmatpush1.msra.mxu0 0.0
    %668 = vmatprep.subr.mxu0 0.0
    %669 = vmatpush1.msra.mxu0 0.0
    %670 = vmatprep.subr.mxu0 0.0
    %671 = vmatpush1.msra.mxu0 0.0
    %672 = vmatprep.subr.mxu0 0.0
    %673 = vmatpush1.msra.mxu0 0.0
    %674 = vmatprep.subr.mxu0 0.0
    %675 = vmatpush1.msra.mxu0 0.0
    %676 = vmatprep.subr.mxu0 0.0
    %677 = vmatpush1.msra.mxu0 0.0
    %678 = vmatprep.subr.mxu0 0.0
    %679 = vmatpush1.msra.mxu0 0.0
    %680 = vmatprep.subr.mxu0 0.0
    %681 = vmatpush1.msra.mxu0 0.0
    %682 = vmatprep.subr.mxu0 0.0
    %683 = vmatpush1.msra.mxu0 0.0
    %684 = vmatprep.subr.mxu0 0.0
    %685 = vmatpush1.msra.mxu0 0.0
    %686 = vmatprep.subr.mxu0 0.0
    %687 = vmatpush1.msra.mxu0 0.0
    %688 = vmatprep.subr.mxu0 0.0
    %689 = vmatpush1.msra.mxu0 0.0
    %690 = vmatprep.subr.mxu0 0.0
    %691 = vmatpush1.msra.mxu0 0.0
    %692 = vmatprep.subr.mxu0 0.0
    %693 = vmatpush1.msra.mxu0 0.0
    %694 = vmatprep.subr.mxu0 0.0
    %695 = vmatpush1.msra.mxu0 0.0
    %696 = vmatprep.subr.mxu0 0.0
    %697 = vmatpush1.msra.mxu0 0.0
    %698 = vmatprep.subr.mxu0 0.0
    %699 = vmatpush1.msra.mxu0 0.0
    %700 = vmatprep.subr.mxu0 0.0
    %701 = vmatpush1.msra.mxu0 0.0
    %702 = vmatprep.subr.mxu0 0.0
    %703 = vmatpush1.msra.mxu0 0.0
    %704 = vmatprep.subr.mxu0 0.0
    %705 = vmatpush1.msra.mxu0 0.0
    %706 = vmatprep.subr.mxu0 0.0
    %707 = vmatpush1.msra.mxu0 0.0
    %708 = vmatprep.subr.mxu0 0.0
    %709 = vmatpush1.msra.mxu0 0.0
    %710 = vmatprep.mubr.f32.mxu0 0.0
    %711 = vmatmul.mubr.f32.gmra.mrb[0].mxu0 %v644
    %v712 = vpop.f32.mrb[0].mxu0
    %v713 = vadd.f32 0.0, %v712
    %v714 = vpop.f32.mrb[0].mxu0
    %715 = vdwg.mxu0
    %v716 = vadd.f32 %v637, %v713
    %v717 = vld [vmem:[#allocation4] sm:$0x3]
    %v718 = vxor.u32 %v716, 2147483648
    %v719 = vmul.f32 %v718, 1.442695
    %v720 = vpow.pop %v719
    %v721 = vadd.f32 %v720, 1.0
    %v722 = vrcp.pop %v721
    %v723 = vmul.f32 1.0, %v722
    %v724 = vtanh.pop %v716
    %726 = vrot.lane.b32.xlu0 %v717, 32
    %v727 = vpop.permute.xlu0 %726
    %v729 = vmul.f32 %v723, %v727
    %731 = vrot.lane.b32.xlu0 %v724, 64
    %v732 = vpop.permute.xlu0 %731
    %v734 = vmul.f32 %v723, %v732
    %736 = vrot.lane.b32.xlu0 %v734, 32
    %v737 = vpop.permute.xlu0 %736
    %v739 = vadd.f32 %v729, %v737
    %v740 = vtanh.pop %v739
    %742 = vrot.lane.b32.xlu0 %v740, 64
    %v743 = vpop.permute.xlu0 %742
    %v745 = vmul.f32 %v723, %v743
    %747 = vrot.lane.b32.xlu0 %v745, 32
    %v748 = vpop.permute.xlu0 %747
    %750 = vst.msk [vmem:[#allocation3] sm:$0x3] %vm158, %v748
    %752 = vrot.lane.b32.xlu0 %v739, 96
    %v753 = vpop.permute.xlu0 %752
    %755 = vst.msk [vmem:[#allocation4] sm:$0x3] %vm158, %v753
    %v756 = vld [vmem:[#allocation2 + $0xa] sm:$0x3]
    %v757 = vld [vmem:[#allocation3] sm:$0x3]
    %v758 = vld [vmem:[%s2] sm:$0xff]
    %v759 = vld [vmem:[%s2 + $0x8] sm:$0xff]
    %v760 = vld [vmem:[%s2 + $0x10] sm:$0xff]
    %v761 = vld [vmem:[%s2 + $0x18] sm:$0xff]
    %v763 = vsel %vm74, %v757, 0
    %765 = vmatprep.subr.mxu0 0.0
    %766 = vmatpush1.msra.mxu0 %v758
    %767 = vmatprep.subr.mxu0 0.0
    %768 = vmatpush1.msra.mxu0 %v759
    %769 = vmatprep.subr.mxu0 0.0
    %770 = vmatpush1.msra.mxu0 %v760
    %771 = vmatprep.subr.mxu0 0.0
    %772 = vmatpush1.msra.mxu0 %v761
    %773 = vmatprep.subr.mxu0 0.0
    %774 = vmatpush1.msra.mxu0 0.0
    %775 = vmatprep.subr.mxu0 0.0
    %776 = vmatpush1.msra.mxu0 0.0
    %777 = vmatprep.subr.mxu0 0.0
    %778 = vmatpush1.msra.mxu0 0.0
    %779 = vmatprep.subr.mxu0 0.0
    %780 = vmatpush1.msra.mxu0 0.0
    %781 = vmatprep.subr.mxu0 0.0
    %782 = vmatpush1.msra.mxu0 0.0
    %783 = vmatprep.subr.mxu0 0.0
    %784 = vmatpush1.msra.mxu0 0.0
    %785 = vmatprep.subr.mxu0 0.0
    %786 = vmatpush1.msra.mxu0 0.0
    %787 = vmatprep.subr.mxu0 0.0
    %788 = vmatpush1.msra.mxu0 0.0
    %789 = vmatprep.subr.mxu0 0.0
    %790 = vmatpush1.msra.mxu0 0.0
    %791 = vmatprep.subr.mxu0 0.0
    %792 = vmatpush1.msra.mxu0 0.0
    %793 = vmatprep.subr.mxu0 0.0
    %794 = vmatpush1.msra.mxu0 0.0
    %795 = vmatprep.subr.mxu0 0.0
    %796 = vmatpush1.msra.mxu0 0.0
    %797 = vmatprep.subr.mxu0 0.0
    %798 = vmatpush1.msra.mxu0 0.0
    %799 = vmatprep.subr.mxu0 0.0
    %800 = vmatpush1.msra.mxu0 0.0
    %801 = vmatprep.subr.mxu0 0.0
    %802 = vmatpush1.msra.mxu0 0.0
    %803 = vmatprep.subr.mxu0 0.0
    %804 = vmatpush1.msra.mxu0 0.0
    %805 = vmatprep.subr.mxu0 0.0
    %806 = vmatpush1.msra.mxu0 0.0
    %807 = vmatprep.subr.mxu0 0.0
    %808 = vmatpush1.msra.mxu0 0.0
    %809 = vmatprep.subr.mxu0 0.0
    %810 = vmatpush1.msra.mxu0 0.0
    %811 = vmatprep.subr.mxu0 0.0
    %812 = vmatpush1.msra.mxu0 0.0
    %813 = vmatprep.subr.mxu0 0.0
    %814 = vmatpush1.msra.mxu0 0.0
    %815 = vmatprep.subr.mxu0 0.0
    %816 = vmatpush1.msra.mxu0 0.0
    %817 = vmatprep.subr.mxu0 0.0
    %818 = vmatpush1.msra.mxu0 0.0
    %819 = vmatprep.subr.mxu0 0.0
    %820 = vmatpush1.msra.mxu0 0.0
    %821 = vmatprep.subr.mxu0 0.0
    %822 = vmatpush1.msra.mxu0 0.0
    %823 = vmatprep.subr.mxu0 0.0
    %824 = vmatpush1.msra.mxu0 0.0
    %825 = vmatprep.subr.mxu0 0.0
    %826 = vmatpush1.msra.mxu0 0.0
    %827 = vmatprep.subr.mxu0 0.0
    %828 = vmatpush1.msra.mxu0 0.0
    %829 = vmatprep.mubr.f32.mxu0 0.0
    %830 = vmatmul.mubr.f32.gmra.mrb[0].mxu0 %v763
    %v831 = vpop.f32.mrb[0].mxu0
    %v832 = vadd.f32 0.0, %v831
    %v833 = vpop.f32.mrb[0].mxu0
    %834 = vdwg.mxu0
    %v835 = vadd.f32 %v756, %v832
    %v836 = vld [vmem:[#allocation4] sm:$0x3]
    %v837 = vxor.u32 %v835, 2147483648
    %v838 = vmul.f32 %v837, 1.442695
    %v839 = vpow.pop %v838
    %v840 = vadd.f32 %v839, 1.0
    %v841 = vrcp.pop %v840
    %v842 = vmul.f32 1.0, %v841
    %v843 = vtanh.pop %v835
    %845 = vrot.lane.b32.xlu0 %v836, 32
    %v846 = vpop.permute.xlu0 %845
    %v848 = vmul.f32 %v842, %v846
    %850 = vrot.lane.b32.xlu0 %v843, 64
    %v851 = vpop.permute.xlu0 %850
    %v853 = vmul.f32 %v842, %v851
    %855 = vrot.lane.b32.xlu0 %v853, 32
    %v856 = vpop.permute.xlu0 %855
    %v858 = vadd.f32 %v848, %v856
    %v859 = vtanh.pop %v858
    %861 = vrot.lane.b32.xlu0 %v859, 64
    %v862 = vpop.permute.xlu0 %861
    %v864 = vmul.f32 %v842, %v862
    %866 = vrot.lane.b32.xlu0 %v864, 32
    %v867 = vpop.permute.xlu0 %866
    %869 = vst.msk [vmem:[#allocation3] sm:$0x3] %vm158, %v867
    %871 = vrot.lane.b32.xlu0 %v858, 96
    %v872 = vpop.permute.xlu0 %871
    %874 = vst.msk [vmem:[#allocation4] sm:$0x3] %vm158, %v872
    %v875 = vld [vmem:[#allocation2 + $0xc] sm:$0x3]
    %v876 = vld [vmem:[#allocation3] sm:$0x3]
    %v877 = vld [vmem:[%s2] sm:$0xff]
    %v878 = vld [vmem:[%s2 + $0x8] sm:$0xff]
    %v879 = vld [vmem:[%s2 + $0x10] sm:$0xff]
    %v880 = vld [vmem:[%s2 + $0x18] sm:$0xff]
    %v882 = vsel %vm74, %v876, 0
    %884 = vmatprep.subr.mxu0 0.0
    %885 = vmatpush1.msra.mxu0 %v877
    %886 = vmatprep.subr.mxu0 0.0
    %887 = vmatpush1.msra.mxu0 %v878
    %888 = vmatprep.subr.mxu0 0.0
    %889 = vmatpush1.msra.mxu0 %v879
    %890 = vmatprep.subr.mxu0 0.0
    %891 = vmatpush1.msra.mxu0 %v880
    %892 = vmatprep.subr.mxu0 0.0
    %893 = vmatpush1.msra.mxu0 0.0
    %894 = vmatprep.subr.mxu0 0.0
    %895 = vmatpush1.msra.mxu0 0.0
    %896 = vmatprep.subr.mxu0 0.0
    %897 = vmatpush1.msra.mxu0 0.0
    %898 = vmatprep.subr.mxu0 0.0
    %899 = vmatpush1.msra.mxu0 0.0
    %900 = vmatprep.subr.mxu0 0.0
    %901 = vmatpush1.msra.mxu0 0.0
    %902 = vmatprep.subr.mxu0 0.0
    %903 = vmatpush1.msra.mxu0 0.0
    %904 = vmatprep.subr.mxu0 0.0
    %905 = vmatpush1.msra.mxu0 0.0
    %906 = vmatprep.subr.mxu0 0.0
    %907 = vmatpush1.msra.mxu0 0.0
    %908 = vmatprep.subr.mxu0 0.0
    %909 = vmatpush1.msra.mxu0 0.0
    %910 = vmatprep.subr.mxu0 0.0
    %911 = vmatpush1.msra.mxu0 0.0
    %912 = vmatprep.subr.mxu0 0.0
    %913 = vmatpush1.msra.mxu0 0.0
    %914 = vmatprep.subr.mxu0 0.0
    %915 = vmatpush1.msra.mxu0 0.0
    %916 = vmatprep.subr.mxu0 0.0
    %917 = vmatpush1.msra.mxu0 0.0
    %918 = vmatprep.subr.mxu0 0.0
    %919 = vmatpush1.msra.mxu0 0.0
    %920 = vmatprep.subr.mxu0 0.0
    %921 = vmatpush1.msra.mxu0 0.0
    %922 = vmatprep.subr.mxu0 0.0
    %923 = vmatpush1.msra.mxu0 0.0
    %924 = vmatprep.subr.mxu0 0.0
    %925 = vmatpush1.msra.mxu0 0.0
    %926 = vmatprep.subr.mxu0 0.0
    %927 = vmatpush1.msra.mxu0 0.0
    %928 = vmatprep.subr.mxu0 0.0
    %929 = vmatpush1.msra.mxu0 0.0
    %930 = vmatprep.subr.mxu0 0.0
    %931 = vmatpush1.msra.mxu0 0.0
    %932 = vmatprep.subr.mxu0 0.0
    %933 = vmatpush1.msra.mxu0 0.0
    %934 = vmatprep.subr.mxu0 0.0
    %935 = vmatpush1.msra.mxu0 0.0
    %936 = vmatprep.subr.mxu0 0.0
    %937 = vmatpush1.msra.mxu0 0.0
    %938 = vmatprep.subr.mxu0 0.0
    %939 = vmatpush1.msra.mxu0 0.0
    %940 = vmatprep.subr.mxu0 0.0
    %941 = vmatpush1.msra.mxu0 0.0
    %942 = vmatprep.subr.mxu0 0.0
    %943 = vmatpush1.msra.mxu0 0.0
    %944 = vmatprep.subr.mxu0 0.0
    %945 = vmatpush1.msra.mxu0 0.0
    %946 = vmatprep.subr.mxu0 0.0
    %947 = vmatpush1.msra.mxu0 0.0
    %948 = vmatprep.mubr.f32.mxu0 0.0
    %949 = vmatmul.mubr.f32.gmra.mrb[0].mxu0 %v882
    %v950 = vpop.f32.mrb[0].mxu0
    %v951 = vadd.f32 0.0, %v950
    %v952 = vpop.f32.mrb[0].mxu0
    %953 = vdwg.mxu0
    %v954 = vadd.f32 %v875, %v951
    %v955 = vld [vmem:[#allocation4] sm:$0x3]
    %v956 = vxor.u32 %v954, 2147483648
    %v957 = vmul.f32 %v956, 1.442695
    %v958 = vpow.pop %v957
    %v959 = vadd.f32 %v958, 1.0
    %v960 = vrcp.pop %v959
    %v961 = vmul.f32 1.0, %v960
    %v962 = vtanh.pop %v954
    %964 = vrot.lane.b32.xlu0 %v955, 32
    %v965 = vpop.permute.xlu0 %964
    %v967 = vmul.f32 %v961, %v965
    %969 = vrot.lane.b32.xlu0 %v962, 64
    %v970 = vpop.permute.xlu0 %969
    %v972 = vmul.f32 %v961, %v970
    %974 = vrot.lane.b32.xlu0 %v972, 32
    %v975 = vpop.permute.xlu0 %974
    %v977 = vadd.f32 %v967, %v975
    %v978 = vtanh.pop %v977
    %980 = vrot.lane.b32.xlu0 %v978, 64
    %v981 = vpop.permute.xlu0 %980
    %v983 = vmul.f32 %v961, %v981
    %985 = vrot.lane.b32.xlu0 %v983, 32
    %v986 = vpop.permute.xlu0 %985
    %988 = vst.msk [vmem:[#allocation3] sm:$0x3] %vm158, %v986
    %990 = vrot.lane.b32.xlu0 %v977, 96
    %v991 = vpop.permute.xlu0 %990
    %993 = vst.msk [vmem:[#allocation4] sm:$0x3] %vm158, %v991
    %v994 = vld [vmem:[#allocation2 + $0xe] sm:$0x3]
    %v995 = vld [vmem:[#allocation3] sm:$0x3]
    %v996 = vld [vmem:[%s2] sm:$0xff]
    %v997 = vld [vmem:[%s2 + $0x8] sm:$0xff]
    %v998 = vld [vmem:[%s2 + $0x10] sm:$0xff]
    %v999 = vld [vmem:[%s2 + $0x18] sm:$0xff]
    %v1001 = vsel %vm74, %v995, 0
    %1003 = vmatprep.subr.mxu0 0.0
    %1004 = vmatpush1.msra.mxu0 %v996
    %1005 = vmatprep.subr.mxu0 0.0
    %1006 = vmatpush1.msra.mxu0 %v997
    %1007 = vmatprep.subr.mxu0 0.0
    %1008 = vmatpush1.msra.mxu0 %v998
    %1009 = vmatprep.subr.mxu0 0.0
    %1010 = vmatpush1.msra.mxu0 %v999
    %1011 = vmatprep.subr.mxu0 0.0
    %1012 = vmatpush1.msra.mxu0 0.0
    %1013 = vmatprep.subr.mxu0 0.0
    %1014 = vmatpush1.msra.mxu0 0.0
    %1015 = vmatprep.subr.mxu0 0.0
    %1016 = vmatpush1.msra.mxu0 0.0
    %1017 = vmatprep.subr.mxu0 0.0
    %1018 = vmatpush1.msra.mxu0 0.0
    %1019 = vmatprep.subr.mxu0 0.0
    %1020 = vmatpush1.msra.mxu0 0.0
    %1021 = vmatprep.subr.mxu0 0.0
    %1022 = vmatpush1.msra.mxu0 0.0
    %1023 = vmatprep.subr.mxu0 0.0
    %1024 = vmatpush1.msra.mxu0 0.0
    %1025 = vmatprep.subr.mxu0 0.0
    %1026 = vmatpush1.msra.mxu0 0.0
    %1027 = vmatprep.subr.mxu0 0.0
    %1028 = vmatpush1.msra.mxu0 0.0
    %1029 = vmatprep.subr.mxu0 0.0
    %1030 = vmatpush1.msra.mxu0 0.0
    %1031 = vmatprep.subr.mxu0 0.0
    %1032 = vmatpush1.msra.mxu0 0.0
    %1033 = vmatprep.subr.mxu0 0.0
    %1034 = vmatpush1.msra.mxu0 0.0
    %1035 = vmatprep.subr.mxu0 0.0
    %1036 = vmatpush1.msra.mxu0 0.0
    %1037 = vmatprep.subr.mxu0 0.0
    %1038 = vmatpush1.msra.mxu0 0.0
    %1039 = vmatprep.subr.mxu0 0.0
    %1040 = vmatpush1.msra.mxu0 0.0
    %1041 = vmatprep.subr.mxu0 0.0
    %1042 = vmatpush1.msra.mxu0 0.0
    %1043 = vmatprep.subr.mxu0 0.0
    %1044 = vmatpush1.msra.mxu0 0.0
    %1045 = vmatprep.subr.mxu0 0.0
    %1046 = vmatpush1.msra.mxu0 0.0
    %1047 = vmatprep.subr.mxu0 0.0
    %1048 = vmatpush1.msra.mxu0 0.0
    %1049 = vmatprep.subr.mxu0 0.0
    %1050 = vmatpush1.msra.mxu0 0.0
    %1051 = vmatprep.subr.mxu0 0.0
    %1052 = vmatpush1.msra.mxu0 0.0
    %1053 = vmatprep.subr.mxu0 0.0
    %1054 = vmatpush1.msra.mxu0 0.0
    %1055 = vmatprep.subr.mxu0 0.0
    %1056 = vmatpush1.msra.mxu0 0.0
    %1057 = vmatprep.subr.mxu0 0.0
    %1058 = vmatpush1.msra.mxu0 0.0
    %1059 = vmatprep.subr.mxu0 0.0
    %1060 = vmatpush1.msra.mxu0 0.0
    %1061 = vmatprep.subr.mxu0 0.0
    %1062 = vmatpush1.msra.mxu0 0.0
    %1063 = vmatprep.subr.mxu0 0.0
    %1064 = vmatpush1.msra.mxu0 0.0
    %1065 = vmatprep.subr.mxu0 0.0
    %1066 = vmatpush1.msra.mxu0 0.0
    %1067 = vmatprep.mubr.f32.mxu0 0.0
    %1068 = vmatmul.mubr.f32.gmra.mrb[0].mxu0 %v1001
    %v1069 = vpop.f32.mrb[0].mxu0
    %v1070 = vadd.f32 0.0, %v1069
    %v1071 = vpop.f32.mrb[0].mxu0
    %1072 = vdwg.mxu0
    %v1073 = vadd.f32 %v994, %v1070
    %v1074 = vld [vmem:[#allocation4] sm:$0x3]
    %v1075 = vxor.u32 %v1073, 2147483648
    %v1076 = vmul.f32 %v1075, 1.442695
    %v1077 = vpow.pop %v1076
    %v1078 = vadd.f32 %v1077, 1.0
    %v1079 = vrcp.pop %v1078
    %v1080 = vmul.f32 1.0, %v1079
    %v1081 = vtanh.pop %v1073
    %1083 = vrot.lane.b32.xlu0 %v1074, 32
    %v1084 = vpop.permute.xlu0 %1083
    %v1086 = vmul.f32 %v1080, %v1084
    %1088 = vrot.lane.b32.xlu0 %v1081, 64
    %v1089 = vpop.permute.xlu0 %1088
    %v1091 = vmul.f32 %v1080, %v1089
    %1093 = vrot.lane.b32.xlu0 %v1091, 32
    %v1094 = vpop.permute.xlu0 %1093
    %v1096 = vadd.f32 %v1086, %v1094
    %v1097 = vtanh.pop %v1096
    %1099 = vrot.lane.b32.xlu0 %v1097, 64
    %v1100 = vpop.permute.xlu0 %1099
    %v1102 = vmul.f32 %v1080, %v1100
    %1104 = vrot.lane.b32.xlu0 %v1102, 32
    %v1105 = vpop.permute.xlu0 %1104
    %1107 = vst.msk [vmem:[#allocation3] sm:$0x3] %vm158, %v1105
    %1109 = vrot.lane.b32.xlu0 %v1096, 96
    %v1110 = vpop.permute.xlu0 %1109
    %1112 = vst.msk [vmem:[#allocation4] sm:$0x3] %vm158, %v1110
    %v1113 = vld [vmem:[#allocation3] sm:$0x3]
    %v1114 = vld [vmem:[#allocation5 + $0xe] sm:$0x3]
    %v1115 = vld [vmem:[#allocation8] sm:$0xff]
    %v1116 = vld [vmem:[#allocation8 + $0x8] sm:$0xff]
    %v1117 = vld [vmem:[#allocation8 + $0x10] sm:$0xff]
    %v1118 = vld [vmem:[#allocation8 + $0x18] sm:$0xff]
    %v1119 = vld [vmem:[%s5] sm:$0x1]
    %v1121 = vlaneseq
    %v1122 = vshrl.u32 %v1121, 7
    %v1123 = vsub.s32 0, %v1122
    %v1124 = vrot.slane %v1119, %v1123
    %v1127 = vsel %vm74, %v1114, 0
    %1129 = vmatprep.subr.mxu0 0.0
    %1130 = vmatpush1.msra.mxu0 %v1115
    %1131 = vmatprep.subr.mxu0 0.0
    %1132 = vmatpush1.msra.mxu0 %v1116
    %1133 = vmatprep.subr.mxu0 0.0
    %1134 = vmatpush1.msra.mxu0 %v1117
    %1135 = vmatprep.subr.mxu0 0.0
    %1136 = vmatpush1.msra.mxu0 %v1118
    %1137 = vmatprep.subr.mxu0 0.0
    %1138 = vmatpush1.msra.mxu0 0.0
    %1139 = vmatprep.subr.mxu0 0.0
    %1140 = vmatpush1.msra.mxu0 0.0
    %1141 = vmatprep.subr.mxu0 0.0
    %1142 = vmatpush1.msra.mxu0 0.0
    %1143 = vmatprep.subr.mxu0 0.0
    %1144 = vmatpush1.msra.mxu0 0.0
    %1145 = vmatprep.subr.mxu0 0.0
    %1146 = vmatpush1.msra.mxu0 0.0
    %1147 = vmatprep.subr.mxu0 0.0
    %1148 = vmatpush1.msra.mxu0 0.0
    %1149 = vmatprep.subr.mxu0 0.0
    %1150 = vmatpush1.msra.mxu0 0.0
    %1151 = vmatprep.subr.mxu0 0.0
    %1152 = vmatpush1.msra.mxu0 0.0
    %1153 = vmatprep.subr.mxu0 0.0
    %1154 = vmatpush1.msra.mxu0 0.0
    %1155 = vmatprep.subr.mxu0 0.0
    %1156 = vmatpush1.msra.mxu0 0.0
    %1157 = vmatprep.subr.mxu0 0.0
    %1158 = vmatpush1.msra.mxu0 0.0
    %1159 = vmatprep.subr.mxu0 0.0
    %1160 = vmatpush1.msra.mxu0 0.0
    %1161 = vmatprep.subr.mxu0 0.0
    %1162 = vmatpush1.msra.mxu0 0.0
    %1163 = vmatprep.subr.mxu0 0.0
    %1164 = vmatpush1.msra.mxu0 0.0
    %1165 = vmatprep.subr.mxu0 0.0
    %1166 = vmatpush1.msra.mxu0 0.0
    %1167 = vmatprep.subr.mxu0 0.0
    %1168 = vmatpush1.msra.mxu0 0.0
    %1169 = vmatprep.subr.mxu0 0.0
    %1170 = vmatpush1.msra.mxu0 0.0
    %1171 = vmatprep.subr.mxu0 0.0
    %1172 = vmatpush1.msra.mxu0 0.0
    %1173 = vmatprep.subr.mxu0 0.0
    %1174 = vmatpush1.msra.mxu0 0.0
    %1175 = vmatprep.subr.mxu0 0.0
    %1176 = vmatpush1.msra.mxu0 0.0
    %1177 = vmatprep.subr.mxu0 0.0
    %1178 = vmatpush1.msra.mxu0 0.0
    %1179 = vmatprep.subr.mxu0 0.0
    %1180 = vmatpush1.msra.mxu0 0.0
    %1181 = vmatprep.subr.mxu0 0.0
    %1182 = vmatpush1.msra.mxu0 0.0
    %1183 = vmatprep.subr.mxu0 0.0
    %1184 = vmatpush1.msra.mxu0 0.0
    %1185 = vmatprep.subr.mxu0 0.0
    %1186 = vmatpush1.msra.mxu0 0.0
    %1187 = vmatprep.subr.mxu0 0.0
    %1188 = vmatpush1.msra.mxu0 0.0
    %1189 = vmatprep.subr.mxu0 0.0
    %1190 = vmatpush1.msra.mxu0 0.0
    %1191 = vmatprep.subr.mxu0 0.0
    %1192 = vmatpush1.msra.mxu0 0.0
    %1193 = vmatprep.mubr.f32.mxu0 0.0
    %1194 = vmatmul.mubr.f32.gmra.mrb[0].mxu0 %v1127
    %v1195 = vpop.f32.mrb[0].mxu0
    %v1196 = vadd.f32 %v1124, %v1195
    %v1197 = vpop.f32.mrb[0].mxu0
    %1198 = vdwg.mxu0
    %v1199 = vxor.u32 %v1196, 2147483648
    %v1200 = vmul.f32 %v1199, 1.442695
    %v1201 = vpow.pop %v1200
    %v1202 = vadd.f32 %v1201, 1.0
    %v1203 = vrcp.pop %v1202
    %v1204 = vmul.f32 1.0, %v1203
    %v1205 = vtanh.pop %v1196
    %v1206 = vmul.f32 %v1204, 0.0
    %1208 = vrot.lane.b32.xlu0 %v1205, 64
    %v1209 = vpop.permute.xlu0 %1208
    %v1211 = vmul.f32 %v1204, %v1209
    %1213 = vrot.lane.b32.xlu0 %v1211, 32
    %v1214 = vpop.permute.xlu0 %1213
    %v1216 = vadd.f32 %v1206, %v1214
    %v1217 = vtanh.pop %v1216
    %1219 = vrot.lane.b32.xlu0 %v1217, 64
    %v1220 = vpop.permute.xlu0 %1219
    %v1222 = vmul.f32 %v1204, %v1220
    %v1223 = vld [vmem:[%s6] sm:$0xff]
    %v1224 = vld [vmem:[%s6 + $0x8] sm:$0xff]
    %v1225 = vld [vmem:[%s6 + $0x10] sm:$0xff]
    %v1226 = vld [vmem:[%s6 + $0x18] sm:$0xff]
    %v1227 = vld [vmem:[%s7] sm:$0xff]
    %v1228 = vld [vmem:[%s7 + $0x8] sm:$0xff]
    %v1229 = vld [vmem:[%s7 + $0x10] sm:$0xff]
    %v1230 = vld [vmem:[%s7 + $0x18] sm:$0xff]
    %1232 = vrot.lane.b32.xlu0 %v1222, 32
    %v1233 = vpop.permute.xlu0 %1232
    %v1234 = vsel %vm74, %v1233, 0
    %1236 = vmatprep.subr.mxu0 0.0
    %1237 = vmatpush1.msra.mxu0 %v1227
    %1238 = vmatprep.subr.mxu0 0.0
    %1239 = vmatpush1.msra.mxu0 %v1228
    %1240 = vmatprep.subr.mxu0 0.0
    %1241 = vmatpush1.msra.mxu0 %v1229
    %1242 = vmatprep.subr.mxu0 0.0
    %1243 = vmatpush1.msra.mxu0 %v1230
    %1244 = vmatprep.subr.mxu0 0.0
    %1245 = vmatpush1.msra.mxu0 0.0
    %1246 = vmatprep.subr.mxu0 0.0
    %1247 = vmatpush1.msra.mxu0 0.0
    %1248 = vmatprep.subr.mxu0 0.0
    %1249 = vmatpush1.msra.mxu0 0.0
    %1250 = vmatprep.subr.mxu0 0.0
    %1251 = vmatpush1.msra.mxu0 0.0
    %1252 = vmatprep.subr.mxu0 0.0
    %1253 = vmatpush1.msra.mxu0 0.0
    %1254 = vmatprep.subr.mxu0 0.0
    %1255 = vmatpush1.msra.mxu0 0.0
    %1256 = vmatprep.subr.mxu0 0.0
    %1257 = vmatpush1.msra.mxu0 0.0
    %1258 = vmatprep.subr.mxu0 0.0
    %1259 = vmatpush1.msra.mxu0 0.0
    %1260 = vmatprep.subr.mxu0 0.0
    %1261 = vmatpush1.msra.mxu0 0.0
    %1262 = vmatprep.subr.mxu0 0.0
    %1263 = vmatpush1.msra.mxu0 0.0
    %1264 = vmatprep.subr.mxu0 0.0
    %1265 = vmatpush1.msra.mxu0 0.0
    %1266 = vmatprep.subr.mxu0 0.0
    %1267 = vmatpush1.msra.mxu0 0.0
    %1268 = vmatprep.subr.mxu0 0.0
    %1269 = vmatpush1.msra.mxu0 0.0
    %1270 = vmatprep.subr.mxu0 0.0
    %1271 = vmatpush1.msra.mxu0 0.0
    %1272 = vmatprep.subr.mxu0 0.0
    %1273 = vmatpush1.msra.mxu0 0.0
    %1274 = vmatprep.subr.mxu0 0.0
    %1275 = vmatpush1.msra.mxu0 0.0
    %1276 = vmatprep.subr.mxu0 0.0
    %1277 = vmatpush1.msra.mxu0 0.0
    %1278 = vmatprep.subr.mxu0 0.0
    %1279 = vmatpush1.msra.mxu0 0.0
    %1280 = vmatprep.subr.mxu0 0.0
    %1281 = vmatpush1.msra.mxu0 0.0
    %1282 = vmatprep.subr.mxu0 0.0
    %1283 = vmatpush1.msra.mxu0 0.0
    %1284 = vmatprep.subr.mxu0 0.0
    %1285 = vmatpush1.msra.mxu0 0.0
    %1286 = vmatprep.subr.mxu0 0.0
    %1287 = vmatpush1.msra.mxu0 0.0
    %1288 = vmatprep.subr.mxu0 0.0
    %1289 = vmatpush1.msra.mxu0 0.0
    %1290 = vmatprep.subr.mxu0 0.0
    %1291 = vmatpush1.msra.mxu0 0.0
    %1292 = vmatprep.subr.mxu0 0.0
    %1293 = vmatpush1.msra.mxu0 0.0
    %1294 = vmatprep.subr.mxu0 0.0
    %1295 = vmatpush1.msra.mxu0 0.0
    %1296 = vmatprep.subr.mxu0 0.0
    %1297 = vmatpush1.msra.mxu0 0.0
    %1298 = vmatprep.subr.mxu0 0.0
    %1299 = vmatpush1.msra.mxu0 0.0
    %1300 = vmatprep.mubr.f32.mxu0 0.0
    %1301 = vmatmul.mubr.f32.gmra.mrb[0].mxu0 %v1234
    %v1302 = vpop.f32.mrb[0].mxu0
    %v1303 = vadd.f32 0.0, %v1302
    %v1304 = vpop.f32.mrb[0].mxu0
    %1305 = vdwg.mxu0
    %v1307 = vsel %vm74, %v1113, 0
    %1309 = vmatprep.subr.mxu0 0.0
    %1310 = vmatpush1.msra.mxu0 %v1223
    %1311 = vmatprep.subr.mxu0 0.0
    %1312 = vmatpush1.msra.mxu0 %v1224
    %1313 = vmatprep.subr.mxu0 0.0
    %1314 = vmatpush1.msra.mxu0 %v1225
    %1315 = vmatprep.subr.mxu0 0.0
    %1316 = vmatpush1.msra.mxu0 %v1226
    %1317 = vmatprep.subr.mxu0 0.0
    %1318 = vmatpush1.msra.mxu0 0.0
    %1319 = vmatprep.subr.mxu0 0.0
    %1320 = vmatpush1.msra.mxu0 0.0
    %1321 = vmatprep.subr.mxu0 0.0
    %1322 = vmatpush1.msra.mxu0 0.0
    %1323 = vmatprep.subr.mxu0 0.0
    %1324 = vmatpush1.msra.mxu0 0.0
    %1325 = vmatprep.subr.mxu0 0.0
    %1326 = vmatpush1.msra.mxu0 0.0
    %1327 = vmatprep.subr.mxu0 0.0
    %1328 = vmatpush1.msra.mxu0 0.0
    %1329 = vmatprep.subr.mxu0 0.0
    %1330 = vmatpush1.msra.mxu0 0.0
    %1331 = vmatprep.subr.mxu0 0.0
    %1332 = vmatpush1.msra.mxu0 0.0
    %1333 = vmatprep.subr.mxu0 0.0
    %1334 = vmatpush1.msra.mxu0 0.0
    %1335 = vmatprep.subr.mxu0 0.0
    %1336 = vmatpush1.msra.mxu0 0.0
    %1337 = vmatprep.subr.mxu0 0.0
    %1338 = vmatpush1.msra.mxu0 0.0
    %1339 = vmatprep.subr.mxu0 0.0
    %1340 = vmatpush1.msra.mxu0 0.0
    %1341 = vmatprep.subr.mxu0 0.0
    %1342 = vmatpush1.msra.mxu0 0.0
    %1343 = vmatprep.subr.mxu0 0.0
    %1344 = vmatpush1.msra.mxu0 0.0
    %1345 = vmatprep.subr.mxu0 0.0
    %1346 = vmatpush1.msra.mxu0 0.0
    %1347 = vmatprep.subr.mxu0 0.0
    %1348 = vmatpush1.msra.mxu0 0.0
    %1349 = vmatprep.subr.mxu0 0.0
    %1350 = vmatpush1.msra.mxu0 0.0
    %1351 = vmatprep.subr.mxu0 0.0
    %1352 = vmatpush1.msra.mxu0 0.0
    %1353 = vmatprep.subr.mxu0 0.0
    %1354 = vmatpush1.msra.mxu0 0.0
    %1355 = vmatprep.subr.mxu0 0.0
    %1356 = vmatpush1.msra.mxu0 0.0
    %1357 = vmatprep.subr.mxu0 0.0
    %1358 = vmatpush1.msra.mxu0 0.0
    %1359 = vmatprep.subr.mxu0 0.0
    %1360 = vmatpush1.msra.mxu0 0.0
    %1361 = vmatprep.subr.mxu0 0.0
    %1362 = vmatpush1.msra.mxu0 0.0
    %1363 = vmatprep.subr.mxu0 0.0
    %1364 = vmatpush1.msra.mxu0 0.0
    %1365 = vmatprep.subr.mxu0 0.0
    %1366 = vmatpush1.msra.mxu0 0.0
    %1367 = vmatprep.subr.mxu0 0.0
    %1368 = vmatpush1.msra.mxu0 0.0
    %1369 = vmatprep.subr.mxu0 0.0
    %1370 = vmatpush1.msra.mxu0 0.0
    %1371 = vmatprep.subr.mxu0 0.0
    %1372 = vmatpush1.msra.mxu0 0.0
    %1373 = vmatprep.mubr.f32.mxu0 0.0
    %1374 = vmatmul.mubr.f32.gmra.mrb[0].mxu0 %v1307
    %v1375 = vpop.f32.mrb[0].mxu0
    %v1376 = vadd.f32 %v1303, %v1375
    %v1377 = vpop.f32.mrb[0].mxu0
    %1378 = vdwg.mxu0
    %v1379 = vld [vmem:[%s8] sm:$0x1]
    %v1381 = vlaneseq
    %v1382 = vshrl.u32 %v1381, 7
    %v1383 = vsub.s32 0, %v1382
    %v1384 = vrot.slane %v1379, %v1383
    %v1386 = vadd.f32 %v1376, %v1384
    %vm1387 = vcmask 25600
    %1388 = vst.msk [vmem:[#allocation10] sm:$0x3] %vm1387, %v1386
    // Predicated region
    $region46: #{tpu_custom_call.1} parent=1 // pred_check
      _
    $region47: #{tpu_custom_call.1} parent=1 // pred_check_branch
      %1390 = sbr.rel (0) target = $region49
    $region48: #{tpu_custom_call.1} parent=1 // pred_region
      %s1392 = ssub.s32 32, 32
      %1393 = vsyncadd [#allocation7], %s1392
      %s1395 = sshll.u32 [#allocation10], 4
      %s1396 = int_to_ptr.vmem [resolvable:$true] %s1395
      %1398 = dma.vmem_to_hbm [thread:$0]  %s1396, 32, %s9, [#allocation7]
    $region49: #{tpu_custom_call.1} parent=1 // pred_fallthru
      _
    // Predicated region
    $region50: #{tpu_custom_call.1} parent=1 // pred_check
      _
    $region51: #{tpu_custom_call.1} parent=1 // pred_check_branch
      %1400 = sbr.rel (0) target = $region53
    $region52: #{tpu_custom_call.1} parent=1 // pred_region
      %1401 = dma.done [#allocation7], 32
    $region53: #{tpu_custom_call.1} parent=1 // pred_fallthru
      _
    %1402 = vsyncpa [#allocation6], 1
    %1403 = vsyncpa [#allocation9], 1
    %1404 = vsyncpa [#allocation7], 1

</llo_original>
